<compile_context>
chip_gen: v5e
topology: v5e:2x2
jax: 0.10.0
libtpu: 0.0.40
codegen_flags: <defaults>
</compile_context>

<pallas_src>
import functools

import jax
import jax.numpy as jnp
from jax.experimental import pallas as pl
from jax.experimental.pallas import tpu as pltpu


# ----------------------------------------------------------------------------- kernels


def _timestep_embedder_kernel(tproj_ref, w1_ref, b1_ref, w2_ref, b2_ref,
                              emb_ref, h_ref):
    """Embedding chain: silu(t_proj @ W1 + b1) @ W2 + b2  ->  (embedded, silu(embedded))."""
    h1 = jnp.dot(tproj_ref[...], w1_ref[...], preferred_element_type=jnp.float32)
    h1 = h1 + b1_ref[...].astype(jnp.float32)
    h1 = h1 * jax.nn.sigmoid(h1)                                   # SiLU
    emb = jnp.dot(h1.astype(w2_ref.dtype), w2_ref[...],
                  preferred_element_type=jnp.float32)
    emb = emb + b2_ref[...].astype(jnp.float32)
    emb_ref[...] = emb.astype(emb_ref.dtype)                       # embedded_timestep
    h_ref[...] = (emb * jax.nn.sigmoid(emb)).astype(h_ref.dtype)   # silu(embedded) -> W3 kernel


def _adaln_linear_kernel(h_ref, w3_ref, b3_ref, out_ref):
    """One W3 column tile: out[:, j] = h @ W3[:, j] + b3[j].  Pure, so the grid is 'parallel'."""
    acc = jnp.dot(h_ref[...], w3_ref[...], preferred_element_type=jnp.float32)
    out_ref[...] = (acc + b3_ref[...].astype(jnp.float32)).astype(out_ref.dtype)


# ----------------------------------------------------------------------------- sizing helpers


def _vmem_budget_bytes():
    """Per-core VMEM budget with headroom (v5e/v6e: 128 MiB phys, v7x: 64 MiB phys)."""
    try:
        cap = int(pltpu.get_tpu_info().vmem_capacity_bytes)
    except Exception:
        cap = 64 << 20          # conservative fallback: v7x physical per-TC VMEM
    return int(min(cap * 3 // 4, 64 << 20))


def _round_down_128(x):
    return max(128, (x // 128) * 128)


def _pick_tile_n(d, n_total, batch, w_itemsize, out_itemsize, vmem_budget):
    """Largest lane-aligned W3 column tile whose double-buffered footprint fits `vmem_budget`."""
    if n_total % 128 != 0:
        # TODO(synk): ragged 6*D; fall back to a single full (correct but unaligned) block.
        return n_total
    # Per output column: double-buffered W3 tile + output tile + bias tile.
    per_col = 2 * (d * w_itemsize + batch * out_itemsize + 4)
    # Resident bits: h block (double-buffered, tiny) + slack for compiler scratch.
    fixed = 2 * batch * d * 4 + (2 << 20)
    max_tn = (max(vmem_budget - fixed, per_col * 128) // per_col) // 128 * 128
    max_tn = min(max(128, max_tn), n_total)
    # Keep >= 2 grid steps so both v7x TensorCores get work on the parallel axis.
    if n_total >= 256:
        max_tn = min(max_tn, _round_down_128(n_total // 2))
    # Prefer a tile that evenly divides n_total (uniform, unmasked blocks).
    for cand in range(max_tn, 127, -128):
        if n_total % cand == 0:
            return cand
    return max_tn


# ----------------------------------------------------------------------------- wrapper


def ada_layer_norm_single(timestep, w1, b1, w2, b2, w3, b3, *, tile_n=None,
                          out_dtype=jnp.float32):
    """AdaLayerNormSingle.forward(timestep) -> (linear(silu(embedded)), embedded).

    Weights are stored transposed vs torch.nn.Linear, i.e. (in_features, out_features),
    so y = x @ W + b matches torch's x @ W.T + b.  Weights may be f32 or bf16; MXU
    accumulation is always f32.
    """
    batch = timestep.shape[0]
    in_dim, d = w1.shape
    assert in_dim == 256, "Timesteps projection is fixed at 256 channels"
    assert w2.shape == (d, d)
    n_total = w3.shape[1]
    assert w3.shape[0] == d and n_total == 6 * d

    # Timesteps(num_channels=256, flip_sin_to_cos=True, downscale_freq_shift=0, max_period=1e4)
    half = 128
    freqs = jnp.exp(-jnp.log(10000.0) * jnp.arange(half, dtype=jnp.float32) / half)
    args = timestep.astype(jnp.float32)[:, None] * freqs[None, :]
    t_proj = jnp.concatenate([jnp.cos(args), jnp.sin(args)], axis=-1).astype(w1.dtype)  # (B, 256)

    vmem_budget = _vmem_budget_bytes()

    # ---- kernel 1: embedding chain (small; whole arrays fit VMEM, single invocation) ----
    emb, h = pl.pallas_call(
        _timestep_embedder_kernel,
        out_shape=(jax.ShapeDtypeStruct((batch, d), out_dtype),   # embedded_timestep
                   jax.ShapeDtypeStruct((batch, d), w3.dtype)),   # silu(embedded), matches W3 dtype
        compiler_params=pltpu.CompilerParams(vmem_limit_bytes=vmem_budget),
    )(t_proj, w1, b1.reshape(1, d), w2, b2.reshape(1, d))

    # ---- kernel 2: out = h @ W3 + b3, column-tiled, parallel grid axis ----
    if tile_n is None:
        tn = _pick_tile_n(d, n_total, batch, w3.dtype.itemsize,
                          jnp.dtype(out_dtype).itemsize, vmem_budget)
    else:
        tn = tile_n
    assert tn == n_total or tn % 128 == 0, "tile_n must be a multiple of 128 (lane-dense)"
    grid = (pl.cdiv(n_total, tn),)   # cdiv: never silently drops trailing columns

    out = pl.pallas_call(
        _adaln_linear_kernel,
        out_shape=jax.ShapeDtypeStruct((batch, n_total), out_dtype),
        grid_spec=pltpu.PrefetchScalarGridSpec(
            num_scalar_prefetch=0,
            grid=grid,
            in_specs=[
                pl.BlockSpec((batch, d), lambda j: (0, 0)),   # h: grid-invariant, tiny
                pl.BlockSpec((d, tn),    lambda j: (0, j)),   # W3 column tile (dominant stream)
                pl.BlockSpec((1, tn),    lambda j: (0, j)),   # b3 column tile
            ],
            out_specs=pl.BlockSpec((batch, tn), lambda j: (0, j)),
        ),
        compiler_params=pltpu.CompilerParams(
            # Column tiles are fully independent -> megacore-shardable on v7x.
            dimension_semantics=("parallel",),
            vmem_limit_bytes=vmem_budget,
        ),
    )(h, w3, b3.reshape(1, n_total))
    return out, emb


# ----------------------------------------------------------------------------- demo / check


if __name__ == "__main__":
    key = jax.random.PRNGKey(0)
    kt, k1, k2, k3, k4, k5, k6 = jax.random.split(key, 7)

    batch = 8
    d = 256                      # small example; linear output = 6 * 256 = 1536

    timestep = jax.random.randint(kt, (batch,), 0, 1000).astype(jnp.float32)
    # deterministic synthetic weights (torch Linear weights stored transposed: (in, out))
    w1 = 0.02 * jax.random.normal(k1, (256, d), jnp.float32)
    b1 = 0.02 * jax.random.normal(k2, (d,), jnp.float32)
    w2 = 0.02 * jax.random.normal(k3, (d, d), jnp.float32)
    b2 = 0.02 * jax.random.normal(k4, (d,), jnp.float32)
    w3 = 0.02 * jax.random.normal(k5, (d, 6 * d), jnp.float32)
    b3 = 0.02 * jax.random.normal(k6, (6 * d,), jnp.float32)

    fn = jax.jit(functools.partial(ada_layer_norm_single,
                                   w1=w1, b1=b1, w2=w2, b2=b2, w3=w3, b3=b3))
    out, emb = jax.block_until_ready(fn(timestep))

    # ---- pure-JAX reference (mirrors the PyTorch forward) ----
    hp = jax.lax.Precision.HIGHEST
    half = 128
    freqs = jnp.exp(-jnp.log(10000.0) * jnp.arange(half, dtype=jnp.float32) / half)
    args = timestep[:, None] * freqs[None, :]
    t_proj = jnp.concatenate([jnp.cos(args), jnp.sin(args)], axis=-1)
    h1 = jnp.dot(t_proj, w1, precision=hp) + b1
    h1 = h1 * jax.nn.sigmoid(h1)
    emb_ref = jnp.dot(h1, w2, precision=hp) + b2
    h2 = emb_ref * jax.nn.sigmoid(emb_ref)
    out_ref = jnp.dot(h2, w3, precision=hp) + b3

    def rel_err(a, b):
        return float(jnp.max(jnp.abs(a - b)) / (jnp.max(jnp.abs(b)) + 1e-12))

    assert rel_err(emb, emb_ref) < 1e-3, "embedded_timestep mismatch vs reference"
    assert rel_err(out, out_ref) < 1e-3, "linear(silu(embedded)) mismatch vs reference"

    # bf16 weight storage (halves the dominant W3 HBM traffic; f32 accumulation kept).
    fn_bf16 = jax.jit(functools.partial(
        ada_layer_norm_single,
        w1=w1.astype(jnp.bfloat16), b1=b1,
        w2=w2.astype(jnp.bfloat16), b2=b2,
        w3=w3.astype(jnp.bfloat16), b3=b3))
    out_bf, emb_bf = jax.block_until_ready(fn_bf16(timestep))
    assert rel_err(emb_bf, emb_ref) < 3e-2, "bf16-weight embedded_timestep mismatch"
    assert rel_err(out_bf, out_ref) < 3e-2, "bf16-weight output mismatch"

    print("KERNEL_OK")
</pallas_src>

<mosaic_0001>
module attributes {stable_mosaic.version = 11 : i64} {
  func.func @_timestep_embedder_kernel(%arg0: memref<8x256xf32, #tpu.memory_space<vmem>>, %arg1: memref<256x256xf32, #tpu.memory_space<vmem>>, %arg2: memref<1x256xf32, #tpu.memory_space<vmem>>, %arg3: memref<256x256xf32, #tpu.memory_space<vmem>>, %arg4: memref<1x256xf32, #tpu.memory_space<vmem>>, %arg5: memref<8x256xf32, #tpu.memory_space<vmem>>, %arg6: memref<8x256xf32, #tpu.memory_space<vmem>>) attributes {dimension_semantics = [], scalar_prefetch = 0 : i64, scratch_operands = 0 : i64, tpu.core_type = #tpu.core_type<tc>} {
    %c0 = arith.constant 0 : index
    %c0_0 = arith.constant 0 : index
    %0 = vector.load %arg0[%c0, %c0_0] : memref<8x256xf32, #tpu.memory_space<vmem>>, vector<8x256xf32>
    %c0_1 = arith.constant 0 : index
    %c0_2 = arith.constant 0 : index
    %1 = vector.load %arg1[%c0_1, %c0_2] : memref<256x256xf32, #tpu.memory_space<vmem>>, vector<256x256xf32>
    %cst = arith.constant dense<0.000000e+00> : vector<8x256xf32>
    %2 = tpu.matmul %0, %1, %cst {dimension_numbers = #tpu.dot_dimension_numbers<[1], [0], [0], [1], [0, 0, 1, 1], [], []>} : vector<8x256xf32>, vector<256x256xf32>, vector<8x256xf32> -> vector<8x256xf32>
    %c0_3 = arith.constant 0 : index
    %c0_4 = arith.constant 0 : index
    %3 = vector.load %arg2[%c0_3, %c0_4] : memref<1x256xf32, #tpu.memory_space<vmem>>, vector<1x256xf32>
    %4 = vector.broadcast %3 : vector<1x256xf32> to vector<8x256xf32>
    %5 = arith.addf %2, %4 : vector<8x256xf32>
    %6 = arith.negf %5 : vector<8x256xf32>
    %7 = math.exp %6 : vector<8x256xf32>
    %cst_5 = arith.constant 1.000000e+00 : f32
    %8 = vector.broadcast %cst_5 : f32 to vector<8x256xf32>
    %9 = arith.addf %8, %7 : vector<8x256xf32>
    %10 = arith.divf %8, %9 : vector<8x256xf32>
    %11 = arith.mulf %5, %10 : vector<8x256xf32>
    %c0_6 = arith.constant 0 : index
    %c0_7 = arith.constant 0 : index
    %12 = vector.load %arg3[%c0_6, %c0_7] : memref<256x256xf32, #tpu.memory_space<vmem>>, vector<256x256xf32>
    %cst_8 = arith.constant dense<0.000000e+00> : vector<8x256xf32>
    %13 = tpu.matmul %11, %12, %cst_8 {dimension_numbers = #tpu.dot_dimension_numbers<[1], [0], [0], [1], [0, 0, 1, 1], [], []>} : vector<8x256xf32>, vector<256x256xf32>, vector<8x256xf32> -> vector<8x256xf32>
    %c0_9 = arith.constant 0 : index
    %c0_10 = arith.constant 0 : index
    %14 = vector.load %arg4[%c0_9, %c0_10] : memref<1x256xf32, #tpu.memory_space<vmem>>, vector<1x256xf32>
    %15 = vector.broadcast %14 : vector<1x256xf32> to vector<8x256xf32>
    %16 = arith.addf %13, %15 : vector<8x256xf32>
    %c0_11 = arith.constant 0 : index
    %c0_12 = arith.constant 0 : index
    %17 = vector.load %arg5[%c0_11, %c0_12] : memref<8x256xf32, #tpu.memory_space<vmem>>, vector<8x256xf32>
    tpu.vector_store %arg5[%c0_11, %c0_12], %16 {strides = array<i32>} : memref<8x256xf32, #tpu.memory_space<vmem>>, vector<8x256xf32>,
    %18 = arith.negf %16 : vector<8x256xf32>
    %19 = math.exp %18 : vector<8x256xf32>
    %cst_13 = arith.constant 1.000000e+00 : f32
    %20 = vector.broadcast %cst_13 : f32 to vector<8x256xf32>
    %21 = arith.addf %20, %19 : vector<8x256xf32>
    %22 = arith.divf %20, %21 : vector<8x256xf32>
    %23 = arith.mulf %16, %22 : vector<8x256xf32>
    %c0_14 = arith.constant 0 : index
    %c0_15 = arith.constant 0 : index
    %24 = vector.load %arg6[%c0_14, %c0_15] : memref<8x256xf32, #tpu.memory_space<vmem>>, vector<8x256xf32>
    tpu.vector_store %arg6[%c0_14, %c0_15], %23 {strides = array<i32>} : memref<8x256xf32, #tpu.memory_space<vmem>>, vector<8x256xf32>,
    return
  }
}

module attributes {stable_mosaic.version = 11 : i64} {
  func.func @_adaln_linear_kernel(%arg0: i32, %arg1: memref<8x256xf32, #tpu.memory_space<vmem>>, %arg2: memref<256x768xf32, #tpu.memory_space<vmem>>, %arg3: memref<1x768xf32, #tpu.memory_space<vmem>>, %arg4: memref<8x768xf32, #tpu.memory_space<vmem>>) attributes {dimension_semantics = [#tpu.dimension_semantics<parallel>], iteration_bounds = array<i64: 2>, scalar_prefetch = 0 : i64, scratch_operands = 0 : i64, tpu.core_type = #tpu.core_type<tc>, window_params = [{pipeline_mode = #tpu.pipeline_mode<synchronous>, transform_indices = @transform_0, window_bounds = array<i64: 8, 256>}, {transform_indices = @transform_1, window_bounds = array<i64: 256, 768>}, {transform_indices = @transform_2, window_bounds = array<i64: 1, 768>}, {transform_indices = @transform_3, window_bounds = array<i64: 8, 768>}]} {
    %c0 = arith.constant 0 : index
    %c0_0 = arith.constant 0 : index
    %0 = vector.load %arg1[%c0, %c0_0] : memref<8x256xf32, #tpu.memory_space<vmem>>, vector<8x256xf32>
    %c0_1 = arith.constant 0 : index
    %c0_2 = arith.constant 0 : index
    %1 = vector.load %arg2[%c0_1, %c0_2] : memref<256x768xf32, #tpu.memory_space<vmem>>, vector<256x768xf32>
    %cst = arith.constant dense<0.000000e+00> : vector<8x768xf32>
    %2 = tpu.matmul %0, %1, %cst {dimension_numbers = #tpu.dot_dimension_numbers<[1], [0], [0], [1], [0, 0, 1, 1], [], []>} : vector<8x256xf32>, vector<256x768xf32>, vector<8x768xf32> -> vector<8x768xf32>
    %c0_3 = arith.constant 0 : index
    %c0_4 = arith.constant 0 : index
    %3 = vector.load %arg3[%c0_3, %c0_4] : memref<1x768xf32, #tpu.memory_space<vmem>>, vector<1x768xf32>
    %4 = vector.broadcast %3 : vector<1x768xf32> to vector<8x768xf32>
    %5 = arith.addf %2, %4 : vector<8x768xf32>
    %c0_5 = arith.constant 0 : index
    %c0_6 = arith.constant 0 : index
    %6 = vector.load %arg4[%c0_5, %c0_6] : memref<8x768xf32, #tpu.memory_space<vmem>>, vector<8x768xf32>
    tpu.vector_store %arg4[%c0_5, %c0_6], %5 {strides = array<i32>} : memref<8x768xf32, #tpu.memory_space<vmem>>, vector<8x768xf32>,
    return
  }
  func.func @transform_0(%arg0: i32) -> (i32, i32) {
    %c0_i32 = arith.constant 0 : i32
    %c0_i32_0 = arith.constant 0 : i32
    %c0_i32_1 = arith.constant 0 : i32
    return %c0_i32, %c0_i32_0 : i32, i32
  }
  func.func @transform_1(%arg0: i32) -> (i32, i32) {
    %c0_i32 = arith.constant 0 : i32
    %c0_i32_0 = arith.constant 0 : i32
    return %c0_i32, %arg0 : i32, i32
  }
  func.func @transform_2(%arg0: i32) -> (i32, i32) {
    %c0_i32 = arith.constant 0 : i32
    %c0_i32_0 = arith.constant 0 : i32
    return %c0_i32, %arg0 : i32, i32
  }
  func.func @transform_3(%arg0: i32) -> (i32, i32) {
    %c0_i32 = arith.constant 0 : i32
    %c0_i32_0 = arith.constant 0 : i32
    return %c0_i32, %arg0 : i32, i32
  }
}

</mosaic_0001>

<llo_original>
// kernel: ada_layer_norm_single.2
$region0: #{ada_layer_norm_single.2}
  #allocation0 [shape = 'u32[]', space=smem, size = 0x4, offset = 0x4, fixed_abs, tag = 'smem constant byte address 0x4 - core index']
  #allocation1 [shape = 'u32[72,128]{1,0:T(1,128)}', space=vmem, size = 0x9000, scoped, tag = 'internal scratch']
  %s0 = inlined_call_operand.vmem [shape: f32[8,256], index: 0, kind: input, shape index: {}]
  %s1 = inlined_call_operand.hbm [shape: f32[256,256], index: 1, kind: input, shape index: {}]
  %s2 = inlined_call_operand.hbm [shape: f32[1,256], index: 2, kind: input, shape index: {}]
  %s3 = inlined_call_operand.hbm [shape: f32[256,256], index: 3, kind: input, shape index: {}]
  %s4 = inlined_call_operand.hbm [shape: f32[1,256], index: 4, kind: input, shape index: {}]
  %s5 = inlined_call_operand.hbm [shape: f32[8,256], index: 5, kind: output, shape index: {0}]
  %s6 = inlined_call_operand.vmem [shape: f32[8,256], index: 6, kind: output, shape index: {1}]
  %7 = xla_tuple %s5, %s6
  %s8 = sld [smem:[#allocation0]]
  $region54: #{ada_layer_norm_single.2} parent=0
    _
  %s10 = ssub.s32 1, %s8
  %s11 = scalar_select 0, %s10, %s8
  $region1: #{ada_layer_norm_single.2} parent=0
    #allocation2 [shape = 'u8[262144]{0}', space=vmem, size = 0x40000, scoped, tag = 'input window, operand 1, single buffered']
    #allocation3 [shape = 's32[1]{0}', space=sflag, size = 0x4, scoped, tag = 'scoped memory for ada_layer_norm_single.2']
    #allocation4 [shape = 's32[1]{0}', space=sflag, size = 0x4, scoped, tag = 'scoped memory for ada_layer_norm_single.2']
    #allocation5 [shape = 'u8[1024]{0}', space=vmem, size = 0x400, scoped, tag = 'input window, operand 2, single buffered']
    #allocation6 [shape = 's32[1]{0}', space=sflag, size = 0x4, scoped, tag = 'scoped memory for ada_layer_norm_single.2']
    #allocation7 [shape = 'u8[262144]{0}', space=vmem, size = 0x40000, scoped, tag = 'input window, operand 3, single buffered']
    #allocation8 [shape = 'u8[1024]{0}', space=vmem, size = 0x400, scoped, tag = 'input window, operand 4, single buffered']
    #allocation9 [shape = 's32[1]{0}', space=sflag, size = 0x4, scoped, tag = 'scoped memory for ada_layer_norm_single.2']
    #allocation10 [shape = 'u8[8192]{0}', space=vmem, size = 0x2000, scoped, tag = 'output window, operand 0, single buffered']
    %12 = vsyncpa [#allocation3], 0
    %13 = vsyncpa [#allocation6], 0
    %14 = vsyncpa [#allocation9], 0
    %15 = vsyncpa [#allocation4], 0
    // Predicated region
    $region2: #{ada_layer_norm_single.2} parent=1 // pred_check
      _
    $region3: #{ada_layer_norm_single.2} parent=1 // pred_check_branch
      %17 = sbr.rel (0) target = $region5
    $region4: #{ada_layer_norm_single.2} parent=1 // pred_region
      _
    $region5: #{ada_layer_norm_single.2} parent=1 // pred_fallthru
      _
    // Predicated region
    $region6: #{ada_layer_norm_single.2} parent=1 // pred_check
      _
    $region7: #{ada_layer_norm_single.2} parent=1 // pred_check_branch
      %19 = sbr.rel (0) target = $region9
    $region8: #{ada_layer_norm_single.2} parent=1 // pred_region
      %21 = vsyncadd [#allocation3], 0
      %s22 = sshll.u32 %s1, 4
      %s23 = int_to_ptr.hbm [resolvable:$true] %s22
      %s24 = sshll.u32 [#allocation2], 4
      %s25 = int_to_ptr.vmem [resolvable:$true] %s24
      %30 = dma.hbm_to_vmem [thread:$0]  %s23, 8192, %s25, [#allocation3], 256, 256, 16
    $region9: #{ada_layer_norm_single.2} parent=1 // pred_fallthru
      _
    // Predicated region
    $region10: #{ada_layer_norm_single.2} parent=1 // pred_check
      _
    $region11: #{ada_layer_norm_single.2} parent=1 // pred_check_branch
      %32 = sbr.rel (0) target = $region13
    $region12: #{ada_layer_norm_single.2} parent=1 // pred_region
      %34 = vsyncadd [#allocation6], 0
      %s36 = sshll.u32 %s2, 4
      %s37 = int_to_ptr.hbm [resolvable:$true] %s36
      %s38 = sshll.u32 [#allocation5], 4
      %s39 = int_to_ptr.vmem [resolvable:$true] %s38
      %41 = dma.hbm_to_vmem [thread:$0]  %s37, 32, %s39, [#allocation6]
    $region13: #{ada_layer_norm_single.2} parent=1 // pred_fallthru
      _
    // Predicated region
    $region14: #{ada_layer_norm_single.2} parent=1 // pred_check
      _
    $region15: #{ada_layer_norm_single.2} parent=1 // pred_check_branch
      %43 = sbr.rel (0) target = $region17
    $region16: #{ada_layer_norm_single.2} parent=1 // pred_region
      %45 = vsyncadd [#allocation6], 0
      %s46 = sshll.u32 %s3, 4
      %s47 = int_to_ptr.hbm [resolvable:$true] %s46
      %s48 = sshll.u32 [#allocation7], 4
      %s49 = int_to_ptr.vmem [resolvable:$true] %s48
      %54 = dma.hbm_to_vmem [thread:$0]  %s47, 8192, %s49, [#allocation6], 256, 256, 16
    $region17: #{ada_layer_norm_single.2} parent=1 // pred_fallthru
      _
    // Predicated region
    $region18: #{ada_layer_norm_single.2} parent=1 // pred_check
      _
    $region19: #{ada_layer_norm_single.2} parent=1 // pred_check_branch
      %56 = sbr.rel (0) target = $region21
    $region20: #{ada_layer_norm_single.2} parent=1 // pred_region
      %58 = vsyncadd [#allocation9], 0
      %s60 = sshll.u32 %s4, 4
      %s61 = int_to_ptr.hbm [resolvable:$true] %s60
      %s62 = sshll.u32 [#allocation8], 4
      %s63 = int_to_ptr.vmem [resolvable:$true] %s62
      %65 = dma.hbm_to_vmem [thread:$0]  %s61, 32, %s63, [#allocation9]
    $region21: #{ada_layer_norm_single.2} parent=1 // pred_fallthru
      _
    // Predicated region
    $region22: #{ada_layer_norm_single.2} parent=1 // pred_check
      _
    $region23: #{ada_layer_norm_single.2} parent=1 // pred_check_branch
      %67 = sbr.rel (0) target = $region25
    $region24: #{ada_layer_norm_single.2} parent=1 // pred_region
      %69 = dma.done [#allocation3], 8192
    $region25: #{ada_layer_norm_single.2} parent=1 // pred_fallthru
      _
    // Predicated region
    $region26: #{ada_layer_norm_single.2} parent=1 // pred_check
      _
    $region27: #{ada_layer_norm_single.2} parent=1 // pred_check_branch
      %71 = sbr.rel (0) target = $region29
    $region28: #{ada_layer_norm_single.2} parent=1 // pred_region
      %73 = dma.done [#allocation6], 32
    $region29: #{ada_layer_norm_single.2} parent=1 // pred_fallthru
      _
    // Predicated region
    $region30: #{ada_layer_norm_single.2} parent=1 // pred_check
      _
    $region31: #{ada_layer_norm_single.2} parent=1 // pred_check_branch
      %75 = sbr.rel (0) target = $region33
    $region32: #{ada_layer_norm_single.2} parent=1 // pred_region
      %77 = dma.done [#allocation6], 8192
    $region33: #{ada_layer_norm_single.2} parent=1 // pred_fallthru
      _
    // Predicated region
    $region34: #{ada_layer_norm_single.2} parent=1 // pred_check
      _
    $region35: #{ada_layer_norm_single.2} parent=1 // pred_check_branch
      %79 = sbr.rel (0) target = $region37
    $region36: #{ada_layer_norm_single.2} parent=1 // pred_region
      %81 = dma.done [#allocation9], 32
    $region37: #{ada_layer_norm_single.2} parent=1 // pred_fallthru
      _
    %v82 = vld [vmem:[%s0] sm:$0xff]
    %v83 = vld [vmem:[%s0 + $0x8] sm:$0xff]
    %v84 = vld [vmem:[#allocation2] sm:$0xff]
    %v85 = vld [vmem:[#allocation2 + $0x8] sm:$0xff]
    %v86 = vld [vmem:[#allocation2 + $0x10] sm:$0xff]
    %v87 = vld [vmem:[#allocation2 + $0x18] sm:$0xff]
    %v88 = vld [vmem:[#allocation2 + $0x20] sm:$0xff]
    %v89 = vld [vmem:[#allocation2 + $0x28] sm:$0xff]
    %v90 = vld [vmem:[#allocation2 + $0x30] sm:$0xff]
    %v91 = vld [vmem:[#allocation2 + $0x38] sm:$0xff]
    %v92 = vld [vmem:[#allocation2 + $0x40] sm:$0xff]
    %v93 = vld [vmem:[#allocation2 + $0x48] sm:$0xff]
    %v94 = vld [vmem:[#allocation2 + $0x50] sm:$0xff]
    %v95 = vld [vmem:[#allocation2 + $0x58] sm:$0xff]
    %v96 = vld [vmem:[#allocation2 + $0x60] sm:$0xff]
    %v97 = vld [vmem:[#allocation2 + $0x68] sm:$0xff]
    %v98 = vld [vmem:[#allocation2 + $0x70] sm:$0xff]
    %v99 = vld [vmem:[#allocation2 + $0x78] sm:$0xff]
    %v100 = vld [vmem:[#allocation2 + $0x80] sm:$0xff]
    %v101 = vld [vmem:[#allocation2 + $0x88] sm:$0xff]
    %v102 = vld [vmem:[#allocation2 + $0x90] sm:$0xff]
    %v103 = vld [vmem:[#allocation2 + $0x98] sm:$0xff]
    %v104 = vld [vmem:[#allocation2 + $0xa0] sm:$0xff]
    %v105 = vld [vmem:[#allocation2 + $0xa8] sm:$0xff]
    %v106 = vld [vmem:[#allocation2 + $0xb0] sm:$0xff]
    %v107 = vld [vmem:[#allocation2 + $0xb8] sm:$0xff]
    %v108 = vld [vmem:[#allocation2 + $0xc0] sm:$0xff]
    %v109 = vld [vmem:[#allocation2 + $0xc8] sm:$0xff]
    %v110 = vld [vmem:[#allocation2 + $0xd0] sm:$0xff]
    %v111 = vld [vmem:[#allocation2 + $0xd8] sm:$0xff]
    %v112 = vld [vmem:[#allocation2 + $0xe0] sm:$0xff]
    %v113 = vld [vmem:[#allocation2 + $0xe8] sm:$0xff]
    %v114 = vld [vmem:[#allocation2 + $0xf0] sm:$0xff]
    %v115 = vld [vmem:[#allocation2 + $0xf8] sm:$0xff]
    %v116 = vld [vmem:[#allocation2 + $0x100] sm:$0xff]
    %v117 = vld [vmem:[#allocation2 + $0x108] sm:$0xff]
    %v118 = vld [vmem:[#allocation2 + $0x110] sm:$0xff]
    %v119 = vld [vmem:[#allocation2 + $0x118] sm:$0xff]
    %v120 = vld [vmem:[#allocation2 + $0x120] sm:$0xff]
    %v121 = vld [vmem:[#allocation2 + $0x128] sm:$0xff]
    %v122 = vld [vmem:[#allocation2 + $0x130] sm:$0xff]
    %v123 = vld [vmem:[#allocation2 + $0x138] sm:$0xff]
    %v124 = vld [vmem:[#allocation2 + $0x140] sm:$0xff]
    %v125 = vld [vmem:[#allocation2 + $0x148] sm:$0xff]
    %v126 = vld [vmem:[#allocation2 + $0x150] sm:$0xff]
    %v127 = vld [vmem:[#allocation2 + $0x158] sm:$0xff]
    %v128 = vld [vmem:[#allocation2 + $0x160] sm:$0xff]
    %v129 = vld [vmem:[#allocation2 + $0x168] sm:$0xff]
    %v130 = vld [vmem:[#allocation2 + $0x170] sm:$0xff]
    %v131 = vld [vmem:[#allocation2 + $0x178] sm:$0xff]
    %v132 = vld [vmem:[#allocation2 + $0x180] sm:$0xff]
    %v133 = vld [vmem:[#allocation2 + $0x188] sm:$0xff]
    %v134 = vld [vmem:[#allocation2 + $0x190] sm:$0xff]
    %v135 = vld [vmem:[#allocation2 + $0x198] sm:$0xff]
    %v136 = vld [vmem:[#allocation2 + $0x1a0] sm:$0xff]
    %v137 = vld [vmem:[#allocation2 + $0x1a8] sm:$0xff]
    %v138 = vld [vmem:[#allocation2 + $0x1b0] sm:$0xff]
    %v139 = vld [vmem:[#allocation2 + $0x1b8] sm:$0xff]
    %v140 = vld [vmem:[#allocation2 + $0x1c0] sm:$0xff]
    %v141 = vld [vmem:[#allocation2 + $0x1c8] sm:$0xff]
    %v142 = vld [vmem:[#allocation2 + $0x1d0] sm:$0xff]
    %v143 = vld [vmem:[#allocation2 + $0x1d8] sm:$0xff]
    %v144 = vld [vmem:[#allocation2 + $0x1e0] sm:$0xff]
    %v145 = vld [vmem:[#allocation2 + $0x1e8] sm:$0xff]
    %v146 = vld [vmem:[#allocation2 + $0x1f0] sm:$0xff]
    %v147 = vld [vmem:[#allocation2 + $0x1f8] sm:$0xff]
    %v148 = vld [vmem:[#allocation5] sm:$0x3]
    %v150 = vperm.slane %v148, 0
    %v151 = vperm.slane %v148, 1
    %154 = vmatpush.msra.mxu0 %v114
    %155 = vmatpush.msra.mxu0 %v112
    %156 = vmatpush.msra.mxu0 %v110
    %157 = vmatpush.msra.mxu0 %v108
    %158 = vmatpush.msra.mxu0 %v106
    %159 = vmatpush.msra.mxu0 %v104
    %160 = vmatpush.msra.mxu0 %v102
    %161 = vmatpush.msra.mxu0 %v100
    %162 = vmatpush.msra.mxu0 %v98
    %163 = vmatpush.msra.mxu0 %v96
    %164 = vmatpush.msra.mxu0 %v94
    %165 = vmatpush.msra.mxu0 %v92
    %166 = vmatpush.msra.mxu0 %v90
    %167 = vmatpush.msra.mxu0 %v88
    %168 = vmatpush.msra.mxu0 %v86
    %169 = vmatpush.msra.mxu0 %v84
    %170 = vmatmul.f32.gmra.mxu0 %v82
    %v171 = vpop.f32.mrf.mxu0
    %v172 = vadd.f32 %v150, %v171
    %173 = vdwg.mxu0
    %174 = vmatpush.msra.mxu0 %v146
    %175 = vmatpush.msra.mxu0 %v144
    %176 = vmatpush.msra.mxu0 %v142
    %177 = vmatpush.msra.mxu0 %v140
    %178 = vmatpush.msra.mxu0 %v138
    %179 = vmatpush.msra.mxu0 %v136
    %180 = vmatpush.msra.mxu0 %v134
    %181 = vmatpush.msra.mxu0 %v132
    %182 = vmatpush.msra.mxu0 %v130
    %183 = vmatpush.msra.mxu0 %v128
    %184 = vmatpush.msra.mxu0 %v126
    %185 = vmatpush.msra.mxu0 %v124
    %186 = vmatpush.msra.mxu0 %v122
    %187 = vmatpush.msra.mxu0 %v120
    %188 = vmatpush.msra.mxu0 %v118
    %189 = vmatpush.msra.mxu0 %v116
    %190 = vmatmul.f32.gmra.mxu0 %v83
    %v191 = vpop.f32.mrf.mxu0
    %v192 = vadd.f32 %v172, %v191
    %193 = vdwg.mxu0
    %194 = vmatpush.msra.mxu0 %v115
    %195 = vmatpush.msra.mxu0 %v113
    %196 = vmatpush.msra.mxu0 %v111
    %197 = vmatpush.msra.mxu0 %v109
    %198 = vmatpush.msra.mxu0 %v107
    %199 = vmatpush.msra.mxu0 %v105
    %200 = vmatpush.msra.mxu0 %v103
    %201 = vmatpush.msra.mxu0 %v101
    %202 = vmatpush.msra.mxu0 %v99
    %203 = vmatpush.msra.mxu0 %v97
    %204 = vmatpush.msra.mxu0 %v95
    %205 = vmatpush.msra.mxu0 %v93
    %206 = vmatpush.msra.mxu0 %v91
    %207 = vmatpush.msra.mxu0 %v89
    %208 = vmatpush.msra.mxu0 %v87
    %209 = vmatpush.msra.mxu0 %v85
    %210 = vmatmul.f32.gmra.mxu0 %v82
    %v211 = vpop.f32.mrf.mxu0
    %v212 = vadd.f32 %v151, %v211
    %213 = vdwg.mxu0
    %214 = vmatpush.msra.mxu0 %v147
    %215 = vmatpush.msra.mxu0 %v145
    %216 = vmatpush.msra.mxu0 %v143
    %217 = vmatpush.msra.mxu0 %v141
    %218 = vmatpush.msra.mxu0 %v139
    %219 = vmatpush.msra.mxu0 %v137
    %220 = vmatpush.msra.mxu0 %v135
    %221 = vmatpush.msra.mxu0 %v133
    %222 = vmatpush.msra.mxu0 %v131
    %223 = vmatpush.msra.mxu0 %v129
    %224 = vmatpush.msra.mxu0 %v127
    %225 = vmatpush.msra.mxu0 %v125
    %226 = vmatpush.msra.mxu0 %v123
    %227 = vmatpush.msra.mxu0 %v121
    %228 = vmatpush.msra.mxu0 %v119
    %229 = vmatpush.msra.mxu0 %v117
    %230 = vmatmul.f32.gmra.mxu0 %v83
    %v231 = vpop.f32.mrf.mxu0
    %v232 = vadd.f32 %v212, %v231
    %233 = vdwg.mxu0
    %v234 = vxor.u32 %v192, 2147483648
    %v235 = vxor.u32 %v232, 2147483648
    %v236 = vmul.f32 %v234, 1.442695
    %v237 = vpow.pop %v236
    %v238 = vmul.f32 %v235, 1.442695
    %v239 = vpow.pop %v238
    %v240 = vadd.f32 %v237, 1.0
    %v241 = vadd.f32 %v239, 1.0
    %v242 = vrcp.pop %v240
    %v243 = vmul.f32 %v240, %v242
    %v244 = vsub.f32 1.0, %v243
    %v245 = vmul.f32 %v242, %v244
    %v246 = vadd.f32 %v242, %v245
    %vm247 = vweird.f32 %v240
    %vm248 = vweird.f32 %v242
    %vm249 = vmor %vm247, %vm248
    %v250 = vsel %vm249, %v242, %v246
    %v251 = vand.u32 2147483647, %v240
    %vm252 = vcmp.eq.f32.partialorder %v251, 8.507059e+37
    %v253 = vand.u32 %v240, 2147483648
    %v254 = vor.u32 1.1754944e-38, %v253
    %v255 = vsel %vm252, %v254, %v250
    %v256 = vmul.f32 1.0, %v255
    %v257 = vrcp.pop %v241
    %v258 = vmul.f32 %v241, %v257
    %v259 = vsub.f32 1.0, %v258
    %v260 = vmul.f32 %v257, %v259
    %v261 = vadd.f32 %v257, %v260
    %vm262 = vweird.f32 %v241
    %vm263 = vweird.f32 %v257
    %vm264 = vmor %vm262, %vm263
    %v265 = vsel %vm264, %v257, %v261
    %v266 = vand.u32 2147483647, %v241
    %vm267 = vcmp.eq.f32.partialorder %v266, 8.507059e+37
    %v268 = vand.u32 %v241, 2147483648
    %v269 = vor.u32 1.1754944e-38, %v268
    %v270 = vsel %vm267, %v269, %v265
    %v271 = vmul.f32 1.0, %v270
    %v272 = vmul.f32 %v192, %v256
    %v273 = vmul.f32 %v232, %v271
    %v274 = vld [vmem:[#allocation7] sm:$0xff]
    %v275 = vld [vmem:[#allocation7 + $0x8] sm:$0xff]
    %v276 = vld [vmem:[#allocation7 + $0x10] sm:$0xff]
    %v277 = vld [vmem:[#allocation7 + $0x18] sm:$0xff]
    %v278 = vld [vmem:[#allocation7 + $0x20] sm:$0xff]
    %v279 = vld [vmem:[#allocation7 + $0x28] sm:$0xff]
    %v280 = vld [vmem:[#allocation7 + $0x30] sm:$0xff]
    %v281 = vld [vmem:[#allocation7 + $0x38] sm:$0xff]
    %v282 = vld [vmem:[#allocation7 + $0x40] sm:$0xff]
    %v283 = vld [vmem:[#allocation7 + $0x48] sm:$0xff]
    %v284 = vld [vmem:[#allocation7 + $0x50] sm:$0xff]
    %v285 = vld [vmem:[#allocation7 + $0x58] sm:$0xff]
    %v286 = vld [vmem:[#allocation7 + $0x60] sm:$0xff]
    %v287 = vld [vmem:[#allocation7 + $0x68] sm:$0xff]
    %v288 = vld [vmem:[#allocation7 + $0x70] sm:$0xff]
    %v289 = vld [vmem:[#allocation7 + $0x78] sm:$0xff]
    %v290 = vld [vmem:[#allocation7 + $0x80] sm:$0xff]
    %v291 = vld [vmem:[#allocation7 + $0x88] sm:$0xff]
    %v292 = vld [vmem:[#allocation7 + $0x90] sm:$0xff]
    %v293 = vld [vmem:[#allocation7 + $0x98] sm:$0xff]
    %v294 = vld [vmem:[#allocation7 + $0xa0] sm:$0xff]
    %v295 = vld [vmem:[#allocation7 + $0xa8] sm:$0xff]
    %v296 = vld [vmem:[#allocation7 + $0xb0] sm:$0xff]
    %v297 = vld [vmem:[#allocation7 + $0xb8] sm:$0xff]
    %v298 = vld [vmem:[#allocation7 + $0xc0] sm:$0xff]
    %v299 = vld [vmem:[#allocation7 + $0xc8] sm:$0xff]
    %v300 = vld [vmem:[#allocation7 + $0xd0] sm:$0xff]
    %v301 = vld [vmem:[#allocation7 + $0xd8] sm:$0xff]
    %v302 = vld [vmem:[#allocation7 + $0xe0] sm:$0xff]
    %v303 = vld [vmem:[#allocation7 + $0xe8] sm:$0xff]
    %v304 = vld [vmem:[#allocation7 + $0xf0] sm:$0xff]
    %v305 = vld [vmem:[#allocation7 + $0xf8] sm:$0xff]
    %v306 = vld [vmem:[#allocation7 + $0x100] sm:$0xff]
    %v307 = vld [vmem:[#allocation7 + $0x108] sm:$0xff]
    %v308 = vld [vmem:[#allocation7 + $0x110] sm:$0xff]
    %v309 = vld [vmem:[#allocation7 + $0x118] sm:$0xff]
    %v310 = vld [vmem:[#allocation7 + $0x120] sm:$0xff]
    %v311 = vld [vmem:[#allocation7 + $0x128] sm:$0xff]
    %v312 = vld [vmem:[#allocation7 + $0x130] sm:$0xff]
    %v313 = vld [vmem:[#allocation7 + $0x138] sm:$0xff]
    %v314 = vld [vmem:[#allocation7 + $0x140] sm:$0xff]
    %v315 = vld [vmem:[#allocation7 + $0x148] sm:$0xff]
    %v316 = vld [vmem:[#allocation7 + $0x150] sm:$0xff]
    %v317 = vld [vmem:[#allocation7 + $0x158] sm:$0xff]
    %v318 = vld [vmem:[#allocation7 + $0x160] sm:$0xff]
    %v319 = vld [vmem:[#allocation7 + $0x168] sm:$0xff]
    %v320 = vld [vmem:[#allocation7 + $0x170] sm:$0xff]
    %v321 = vld [vmem:[#allocation7 + $0x178] sm:$0xff]
    %v322 = vld [vmem:[#allocation7 + $0x180] sm:$0xff]
    %v323 = vld [vmem:[#allocation7 + $0x188] sm:$0xff]
    %v324 = vld [vmem:[#allocation7 + $0x190] sm:$0xff]
    %v325 = vld [vmem:[#allocation7 + $0x198] sm:$0xff]
    %v326 = vld [vmem:[#allocation7 + $0x1a0] sm:$0xff]
    %v327 = vld [vmem:[#allocation7 + $0x1a8] sm:$0xff]
    %v328 = vld [vmem:[#allocation7 + $0x1b0] sm:$0xff]
    %v329 = vld [vmem:[#allocation7 + $0x1b8] sm:$0xff]
    %v330 = vld [vmem:[#allocation7 + $0x1c0] sm:$0xff]
    %v331 = vld [vmem:[#allocation7 + $0x1c8] sm:$0xff]
    %v332 = vld [vmem:[#allocation7 + $0x1d0] sm:$0xff]
    %v333 = vld [vmem:[#allocation7 + $0x1d8] sm:$0xff]
    %v334 = vld [vmem:[#allocation7 + $0x1e0] sm:$0xff]
    %v335 = vld [vmem:[#allocation7 + $0x1e8] sm:$0xff]
    %v336 = vld [vmem:[#allocation7 + $0x1f0] sm:$0xff]
    %v337 = vld [vmem:[#allocation7 + $0x1f8] sm:$0xff]
    %v338 = vld [vmem:[#allocation8] sm:$0x3]
    %v340 = vperm.slane %v338, 0
    %v341 = vperm.slane %v338, 1
    %344 = vmatpush.msra.mxu0 %v304
    %345 = vmatpush.msra.mxu0 %v302
    %346 = vmatpush.msra.mxu0 %v300
    %347 = vmatpush.msra.mxu0 %v298
    %348 = vmatpush.msra.mxu0 %v296
    %349 = vmatpush.msra.mxu0 %v294
    %350 = vmatpush.msra.mxu0 %v292
    %351 = vmatpush.msra.mxu0 %v290
    %352 = vmatpush.msra.mxu0 %v288
    %353 = vmatpush.msra.mxu0 %v286
    %354 = vmatpush.msra.mxu0 %v284
    %355 = vmatpush.msra.mxu0 %v282
    %356 = vmatpush.msra.mxu0 %v280
    %357 = vmatpush.msra.mxu0 %v278
    %358 = vmatpush.msra.mxu0 %v276
    %359 = vmatpush.msra.mxu0 %v274
    %360 = vmatmul.f32.gmra.mxu0 %v272
    %v361 = vpop.f32.mrf.mxu0
    %v362 = vadd.f32 %v340, %v361
    %363 = vdwg.mxu0
    %364 = vmatpush.msra.mxu0 %v336
    %365 = vmatpush.msra.mxu0 %v334
    %366 = vmatpush.msra.mxu0 %v332
    %367 = vmatpush.msra.mxu0 %v330
    %368 = vmatpush.msra.mxu0 %v328
    %369 = vmatpush.msra.mxu0 %v326
    %370 = vmatpush.msra.mxu0 %v324
    %371 = vmatpush.msra.mxu0 %v322
    %372 = vmatpush.msra.mxu0 %v320
    %373 = vmatpush.msra.mxu0 %v318
    %374 = vmatpush.msra.mxu0 %v316
    %375 = vmatpush.msra.mxu0 %v314
    %376 = vmatpush.msra.mxu0 %v312
    %377 = vmatpush.msra.mxu0 %v310
    %378 = vmatpush.msra.mxu0 %v308
    %379 = vmatpush.msra.mxu0 %v306
    %380 = vmatmul.f32.gmra.mxu0 %v273
    %v381 = vpop.f32.mrf.mxu0
    %v382 = vadd.f32 %v362, %v381
    %383 = vdwg.mxu0
    %384 = vmatpush.msra.mxu0 %v305
    %385 = vmatpush.msra.mxu0 %v303
    %386 = vmatpush.msra.mxu0 %v301
    %387 = vmatpush.msra.mxu0 %v299
    %388 = vmatpush.msra.mxu0 %v297
    %389 = vmatpush.msra.mxu0 %v295
    %390 = vmatpush.msra.mxu0 %v293
    %391 = vmatpush.msra.mxu0 %v291
    %392 = vmatpush.msra.mxu0 %v289
    %393 = vmatpush.msra.mxu0 %v287
    %394 = vmatpush.msra.mxu0 %v285
    %395 = vmatpush.msra.mxu0 %v283
    %396 = vmatpush.msra.mxu0 %v281
    %397 = vmatpush.msra.mxu0 %v279
    %398 = vmatpush.msra.mxu0 %v277
    %399 = vmatpush.msra.mxu0 %v275
    %400 = vmatmul.f32.gmra.mxu0 %v272
    %v401 = vpop.f32.mrf.mxu0
    %v402 = vadd.f32 %v341, %v401
    %403 = vdwg.mxu0
    %404 = vmatpush.msra.mxu0 %v337
    %405 = vmatpush.msra.mxu0 %v335
    %406 = vmatpush.msra.mxu0 %v333
    %407 = vmatpush.msra.mxu0 %v331
    %408 = vmatpush.msra.mxu0 %v329
    %409 = vmatpush.msra.mxu0 %v327
    %410 = vmatpush.msra.mxu0 %v325
    %411 = vmatpush.msra.mxu0 %v323
    %412 = vmatpush.msra.mxu0 %v321
    %413 = vmatpush.msra.mxu0 %v319
    %414 = vmatpush.msra.mxu0 %v317
    %415 = vmatpush.msra.mxu0 %v315
    %416 = vmatpush.msra.mxu0 %v313
    %417 = vmatpush.msra.mxu0 %v311
    %418 = vmatpush.msra.mxu0 %v309
    %419 = vmatpush.msra.mxu0 %v307
    %420 = vmatmul.f32.gmra.mxu0 %v273
    %v421 = vpop.f32.mrf.mxu0
    %v422 = vadd.f32 %v402, %v421
    %423 = vdwg.mxu0
    %424 = vst [vmem:[#allocation10] sm:$0xff] %v382
    %425 = vst [vmem:[#allocation10 + $0x8] sm:$0xff] %v422
    %v426 = vxor.u32 %v382, 2147483648
    %v427 = vxor.u32 %v422, 2147483648
    %v428 = vmul.f32 %v426, 1.442695
    %v429 = vpow.pop %v428
    %v430 = vmul.f32 %v427, 1.442695
    %v431 = vpow.pop %v430
    %v432 = vadd.f32 %v429, 1.0
    %v433 = vadd.f32 %v431, 1.0
    %v434 = vrcp.pop %v432
    %v435 = vmul.f32 %v432, %v434
    %v436 = vsub.f32 1.0, %v435
    %v437 = vmul.f32 %v434, %v436
    %v438 = vadd.f32 %v434, %v437
    %vm439 = vweird.f32 %v432
    %vm440 = vweird.f32 %v434
    %vm441 = vmor %vm439, %vm440
    %v442 = vsel %vm441, %v434, %v438
    %v443 = vand.u32 2147483647, %v432
    %vm444 = vcmp.eq.f32.partialorder %v443, 8.507059e+37
    %v445 = vand.u32 %v432, 2147483648
    %v446 = vor.u32 1.1754944e-38, %v445
    %v447 = vsel %vm444, %v446, %v442
    %v448 = vmul.f32 1.0, %v447
    %v449 = vrcp.pop %v433
    %v450 = vmul.f32 %v433, %v449
    %v451 = vsub.f32 1.0, %v450
    %v452 = vmul.f32 %v449, %v451
    %v453 = vadd.f32 %v449, %v452
    %vm454 = vweird.f32 %v433
    %vm455 = vweird.f32 %v449
    %vm456 = vmor %vm454, %vm455
    %v457 = vsel %vm456, %v449, %v453
    %v458 = vand.u32 2147483647, %v433
    %vm459 = vcmp.eq.f32.partialorder %v458, 8.507059e+37
    %v460 = vand.u32 %v433, 2147483648
    %v461 = vor.u32 1.1754944e-38, %v460
    %v462 = vsel %vm459, %v461, %v457
    %v463 = vmul.f32 1.0, %v462
    %v464 = vmul.f32 %v382, %v448
    %v465 = vmul.f32 %v422, %v463
    %466 = vst [vmem:[%s6] sm:$0xff] %v464
    %467 = vst [vmem:[%s6 + $0x8] sm:$0xff] %v465
    // Predicated region
    $region38: #{ada_layer_norm_single.2} parent=1 // pred_check
      _
    $region39: #{ada_layer_norm_single.2} parent=1 // pred_check_branch
      %469 = sbr.rel (0) target = $region41
    $region40: #{ada_layer_norm_single.2} parent=1 // pred_region
      %471 = vsyncadd [#allocation4], 0
      %s473 = sshll.u32 [#allocation10], 4
      %s474 = int_to_ptr.vmem [resolvable:$true] %s473
      %s475 = sshll.u32 %s5, 4
      %s476 = int_to_ptr.hbm [resolvable:$true] %s475
      %478 = dma.vmem_to_hbm [thread:$0]  %s474, 256, %s476, [#allocation4]
    $region41: #{ada_layer_norm_single.2} parent=1 // pred_fallthru
      _
    // Predicated region
    $region42: #{ada_layer_norm_single.2} parent=1 // pred_check
      _
    $region43: #{ada_layer_norm_single.2} parent=1 // pred_check_branch
      %480 = sbr.rel (0) target = $region45
    $region44: #{ada_layer_norm_single.2} parent=1 // pred_region
      _
    $region45: #{ada_layer_norm_single.2} parent=1 // pred_fallthru
      _
    // Predicated region
    $region46: #{ada_layer_norm_single.2} parent=1 // pred_check
      _
    $region47: #{ada_layer_norm_single.2} parent=1 // pred_check_branch
      %482 = sbr.rel (0) target = $region49
    $region48: #{ada_layer_norm_single.2} parent=1 // pred_region
      %484 = dma.done [#allocation4], 256
    $region49: #{ada_layer_norm_single.2} parent=1 // pred_fallthru
      _
    // Predicated region
    $region50: #{ada_layer_norm_single.2} parent=1 // pred_check
      _
    $region51: #{ada_layer_norm_single.2} parent=1 // pred_check_branch
      %486 = sbr.rel (0) target = $region53
    $region52: #{ada_layer_norm_single.2} parent=1 // pred_region
      _
    $region53: #{ada_layer_norm_single.2} parent=1 // pred_fallthru
      _
    %487 = vsyncpa [#allocation3], 1
    %488 = vsyncpa [#allocation6], 1
    %489 = vsyncpa [#allocation9], 1
    %490 = vsyncpa [#allocation4], 1

// kernel: ada_layer_norm_single.3
$region0: #{ada_layer_norm_single.3}
  #allocation0 [shape = 'u32[]', space=smem, size = 0x4, offset = 0x4, fixed_abs, tag = 'smem constant byte address 0x4 - core index']
  #allocation1 [shape = 'u32[72,128]{1,0:T(1,128)}', space=vmem, size = 0x9000, scoped, tag = 'internal scratch']
  %s0 = inlined_call_operand.vmem [shape: f32[8,256], index: 0, kind: input, shape index: {}]
  %s1 = inlined_call_operand.hbm [shape: f32[256,1536], index: 1, kind: input, shape index: {}]
  %s2 = inlined_call_operand.hbm [shape: f32[1,1536], index: 2, kind: input, shape index: {}]
  %s3 = inlined_call_operand.hbm [shape: f32[8,1536], index: 3, kind: output, shape index: {}]
  %s4 = sld [smem:[#allocation0]]
  $region53: #{ada_layer_norm_single.3} parent=0
    _
  %s6 = ssub.s32 1, %s4
  %s7 = scalar_select 0, %s6, %s4
  $region1: #{ada_layer_norm_single.3} parent=0
    #allocation2 [shape = 'u8[1572864]{0}', space=vmem, size = 0x180000, scoped, tag = 'input window, operand 1']
    #allocation3 [shape = 's32[2]{0}', space=sflag, size = 0x8, scoped, tag = 'scoped memory for ada_layer_norm_single.3']
    #allocation4 [shape = 's32[2]{0}', space=sflag, size = 0x8, scoped, tag = 'scoped memory for ada_layer_norm_single.3']
    #allocation5 [shape = 'u8[6144]{0}', space=vmem, size = 0x1800, scoped, tag = 'input window, operand 2']
    #allocation6 [shape = 's32[2]{0}', space=sflag, size = 0x8, scoped, tag = 'scoped memory for ada_layer_norm_single.3']
    #allocation7 [shape = 'u8[49152]{0}', space=vmem, size = 0xc000, scoped, tag = 'output window, operand 0']
    %8 = vsyncpa [#allocation3], 0
    %s9 = scalar_lea.sflag [#allocation3], 1
    %10 = vsyncpa %s9, 0
    %11 = vsyncpa [#allocation6], 0
    %s12 = scalar_lea.sflag [#allocation6], 1
    %13 = vsyncpa %s12, 0
    %14 = vsyncpa [#allocation4], 0
    %s15 = scalar_lea.sflag [#allocation4], 1
    %16 = vsyncpa %s15, 0
    loop: start=0, step=1, limit=4
    $region2: #{ada_layer_norm_single.3} parent=1 // loop_pre_header
      _
    $region3: #{ada_layer_norm_single.3} parent=1 // loop_header
      %s18 = sphi 0, %s22
      %p19 = scmp.ge.s32.totalorder %s18, 4
      %s26 = sphi 0, %s26
      %s28 = sphi 0, %s26
      %s29 = sphi 0, %s28
      %s43 = sphi 0, %s29
      %s49 = sphi 0, %s51
      %s52 = sphi 0, %s49
      %s53 = sphi 0, %s52
      %s69 = sphi 0, %s53
      %s75 = sphi 0, %s77
      %s78 = sphi 0, %s75
      %s79 = sphi 0, %s78
      %s95 = sphi 0, %s79
      %s101 = sphi 0, %s103
      %s104 = sphi 0, %s101
      %s105 = sphi 0, %s104
      %s121 = sphi 0, %s105
    $region4: #{ada_layer_norm_single.3} parent=1 // loop_header_branch
      %21 = sbr.rel (%p19) target = $region8
    $region5: #{ada_layer_norm_single.3} parent=1 // loop_body
      %s23 = ssub.s32 %s18, 1
      %s24 = ssub.s32 %s18, 2
      %s25 = sadd.s32 %s18, 1
      %s27 = sadd.s32 %s26, 1
      %p30 = scmp.eq.s32.totalorder %s18, 1
      %p31 = scmp.ne.s32.totalorder %s26, %s28
      %p32 = scmp.eq.s32.totalorder %s18, 0
      %p33 = por %p31, %p32
      %p34 = scmp.ne.s32.totalorder %s26, %s28
      %p35 = scmp.eq.s32.totalorder %s23, 1
      %p36 = por %p34, %p35
      %p37 = scmp.ne.s32.totalorder %s28, %s29
      %p38 = scmp.eq.s32.totalorder %s23, 0
      %p39 = por %p37, %p38
      %p40 = scmp.ne.s32.totalorder %s28, %s29
      %p41 = scmp.eq.s32.totalorder %s24, 1
      %p42 = por %p40, %p41
      %p44 = scmp.ne.s32.totalorder %s29, %s43
      %p45 = scmp.eq.s32.totalorder %s24, 0
      %p46 = por %p44, %p45
      %s47 = ssub.s32 %s18, %s25
      %p48 = scmp.eq.s32.totalorder %s47, 0
      %s50 = sadd.s32 %s49, 1
      %s51 = scalar_select %p48, %s49, %s50
      %p54 = pneg %p48
      %p55 = scmp.eq.s32.totalorder %s18, 1
      %p56 = por %p54, %p55
      %p57 = scmp.ne.s32.totalorder %s49, %s52
      %p58 = scmp.eq.s32.totalorder %s18, 0
      %p59 = por %p57, %p58
      %p60 = scmp.ne.s32.totalorder %s49, %s52
      %p61 = scmp.eq.s32.totalorder %s23, 1
      %p62 = por %p60, %p61
      %p63 = scmp.ne.s32.totalorder %s52, %s53
      %p64 = scmp.eq.s32.totalorder %s23, 0
      %p65 = por %p63, %p64
      %p66 = scmp.ne.s32.totalorder %s52, %s53
      %p67 = scmp.eq.s32.totalorder %s24, 1
      %p68 = por %p66, %p67
      %p70 = scmp.ne.s32.totalorder %s53, %s69
      %p71 = scmp.eq.s32.totalorder %s24, 0
      %p72 = por %p70, %p71
      %s73 = ssub.s32 %s18, %s25
      %p74 = scmp.eq.s32.totalorder %s73, 0
      %s76 = sadd.s32 %s75, 1
      %s77 = scalar_select %p74, %s75, %s76
      %p80 = pneg %p74
      %p81 = scmp.eq.s32.totalorder %s18, 1
      %p82 = por %p80, %p81
      %p83 = scmp.ne.s32.totalorder %s75, %s78
      %p84 = scmp.eq.s32.totalorder %s18, 0
      %p85 = por %p83, %p84
      %p86 = scmp.ne.s32.totalorder %s75, %s78
      %p87 = scmp.eq.s32.totalorder %s23, 1
      %p88 = por %p86, %p87
      %p89 = scmp.ne.s32.totalorder %s78, %s79
      %p90 = scmp.eq.s32.totalorder %s23, 0
      %p91 = por %p89, %p90
      %p92 = scmp.ne.s32.totalorder %s78, %s79
      %p93 = scmp.eq.s32.totalorder %s24, 1
      %p94 = por %p92, %p93
      %p96 = scmp.ne.s32.totalorder %s79, %s95
      %p97 = scmp.eq.s32.totalorder %s24, 0
      %p98 = por %p96, %p97
      %s99 = ssub.s32 %s18, %s25
      %p100 = scmp.eq.s32.totalorder %s99, 0
      %s102 = sadd.s32 %s101, 1
      %s103 = scalar_select %p100, %s101, %s102
      %p106 = pneg %p100
      %p107 = scmp.eq.s32.totalorder %s18, 1
      %p108 = por %p106, %p107
      %p109 = scmp.ne.s32.totalorder %s101, %s104
      %p110 = scmp.eq.s32.totalorder %s18, 0
      %p111 = por %p109, %p110
      %p112 = scmp.ne.s32.totalorder %s101, %s104
      %p113 = scmp.eq.s32.totalorder %s23, 1
      %p114 = por %p112, %p113
      %p115 = scmp.ne.s32.totalorder %s104, %s105
      %p116 = scmp.eq.s32.totalorder %s23, 0
      %p117 = por %p115, %p116
      %p118 = scmp.ne.s32.totalorder %s104, %s105
      %p119 = scmp.eq.s32.totalorder %s24, 1
      %p120 = por %p118, %p119
      %p122 = scmp.ne.s32.totalorder %s105, %s121
      %p123 = scmp.eq.s32.totalorder %s24, 0
      %p124 = por %p122, %p123
      %p125 = scmp.le.s32.totalorder 1, %s18
      %p126 = scmp.lt.s32.totalorder %s18, 3
      %p127 = pnand %p125, %p126
      %p128 = pneg %p127
      // Predicated region
      $region9: #{ada_layer_norm_single.3} parent=5 // pred_check
        _
      $region10: #{ada_layer_norm_single.3} parent=5 // pred_check_branch
        %130 = sbr.rel (%p127) target = $region12
      $region11: #{ada_layer_norm_single.3} parent=5 // pred_region
        %s131 = ssub.s32 %s18, 1
        // Predicated region
        $region13: #{ada_layer_norm_single.3} parent=11 // pred_check
          %p132 = pneg %p39
        $region14: #{ada_layer_norm_single.3} parent=11 // pred_check_branch
          %134 = sbr.rel (%p132) target = $region16
        $region15: #{ada_layer_norm_single.3} parent=11 // pred_region
          _
        $region16: #{ada_layer_norm_single.3} parent=11 // pred_fallthru
          _
      $region12: #{ada_layer_norm_single.3} parent=5 // pred_fallthru
        _
      %p135 = scmp.lt.s32.totalorder %s18, 2
      // Predicated region
      $region17: #{ada_layer_norm_single.3} parent=5 // pred_check
        %p136 = pneg %p135
      $region18: #{ada_layer_norm_single.3} parent=5 // pred_check_branch
        %138 = sbr.rel (%p136) target = $region20
      $region19: #{ada_layer_norm_single.3} parent=5 // pred_region
        // Predicated region
        $region21: #{ada_layer_norm_single.3} parent=19 // pred_check
          %p139 = pneg %p59
        $region22: #{ada_layer_norm_single.3} parent=19 // pred_check_branch
          %141 = sbr.rel (%p139) target = $region24
        $region23: #{ada_layer_norm_single.3} parent=19 // pred_region
          %s142 = sand.u32 %s49, 1
          %s143 = scalar_lea.sflag [#allocation3], %s142
          %s144 = sand.u32 %s49, 1
          %s145 = smul.addr %s144, 1536
          %s146 = scalar_lea.vmem [#allocation2], %s145
          %s147 = smul.u32 6, %s18
          %149 = vsyncadd %s143, 0
          %s150 = smul.addr %s147, 8
          %s151 = scalar_lea.hbm %s1, %s150
          %s152 = sshll.u32 %s151, 4
          %s153 = int_to_ptr.hbm [resolvable:$true] %s152
          %s154 = sshll.u32 %s146, 4
          %s155 = int_to_ptr.vmem [resolvable:$true] %s154
          %160 = dma.hbm_to_vmem [thread:$0]  %s153, 24576, %s155, %s143, 1536, 768, 48
        $region24: #{ada_layer_norm_single.3} parent=19 // pred_fallthru
          _
        // Predicated region
        $region25: #{ada_layer_norm_single.3} parent=19 // pred_check
          %p161 = pneg %p85
        $region26: #{ada_layer_norm_single.3} parent=19 // pred_check_branch
          %163 = sbr.rel (%p161) target = $region28
        $region27: #{ada_layer_norm_single.3} parent=19 // pred_region
          %s164 = sand.u32 %s75, 1
          %s165 = scalar_lea.sflag [#allocation6], %s164
          %s166 = sand.u32 %s75, 1
          %s167 = smul.addr %s166, 6
          %s168 = scalar_lea.vmem [#allocation5], %s167
          %s169 = smul.u32 6, %s18
          %171 = vsyncadd %s165, 0
          %s172 = scalar_lea.hbm %s2, %s169
          %s174 = sshll.u32 %s172, 4
          %s175 = int_to_ptr.hbm [resolvable:$true] %s174
          %s176 = sshll.u32 %s168, 4
          %s177 = int_to_ptr.vmem [resolvable:$true] %s176
          %179 = dma.hbm_to_vmem [thread:$0]  %s175, 96, %s177, %s165
        $region28: #{ada_layer_norm_single.3} parent=19 // pred_fallthru
          _
      $region20: #{ada_layer_norm_single.3} parent=5 // pred_fallthru
        _
      %p180 = scmp.le.s32.totalorder 1, %s18
      %p181 = scmp.lt.s32.totalorder %s18, 3
      %p182 = pnand %p180, %p181
      %p183 = pneg %p182
      // Predicated region
      $region29: #{ada_layer_norm_single.3} parent=5 // pred_check
        _
      $region30: #{ada_layer_norm_single.3} parent=5 // pred_check_branch
        %185 = sbr.rel (%p182) target = $region32
      $region31: #{ada_layer_norm_single.3} parent=5 // pred_region
        %s186 = ssub.s32 %s18, 1
        %s187 = sand.u32 %s52, 1
        %s188 = scalar_lea.sflag [#allocation3], %s187
        %s189 = sand.u32 %s52, 1
        %s190 = smul.addr %s189, 1536
        %s191 = scalar_lea.vmem [#allocation2], %s190
        // Predicated region
        $region33: #{ada_layer_norm_single.3} parent=31 // pred_check
          %p192 = pneg %p65
        $region34: #{ada_layer_norm_single.3} parent=31 // pred_check_branch
          %194 = sbr.rel (%p192) target = $region36
        $region35: #{ada_layer_norm_single.3} parent=31 // pred_region
          %196 = dma.done %s188, 24576
        $region36: #{ada_layer_norm_single.3} parent=31 // pred_fallthru
          _
        %s197 = sand.u32 %s78, 1
        %s198 = scalar_lea.sflag [#allocation6], %s197
        %s199 = sand.u32 %s78, 1
        %s200 = smul.addr %s199, 6
        %s201 = scalar_lea.vmem [#allocation5], %s200
        // Predicated region
        $region37: #{ada_layer_norm_single.3} parent=31 // pred_check
          %p202 = pneg %p91
        $region38: #{ada_layer_norm_single.3} parent=31 // pred_check_branch
          %204 = sbr.rel (%p202) target = $region40
        $region39: #{ada_layer_norm_single.3} parent=31 // pred_region
          %206 = dma.done %s198, 96
        $region40: #{ada_layer_norm_single.3} parent=31 // pred_fallthru
          _
        %p207 = pneg %p39
        %p208 = pneg %p36
        %s209 = sand.u32 %s52, 1
        %s210 = scalar_lea.sflag [#allocation3], %s209
        %s211 = sand.u32 %s52, 1
        %s212 = smul.addr %s211, 1536
        %s213 = scalar_lea.vmem [#allocation2], %s212
        %p214 = pneg %p65
        %p215 = pneg %p62
        %s216 = sand.u32 %s78, 1
        %s217 = scalar_lea.sflag [#allocation6], %s216
        %s218 = sand.u32 %s78, 1
        %s219 = smul.addr %s218, 6
        %s220 = scalar_lea.vmem [#allocation5], %s219
        %p221 = pneg %p91
        %p222 = pneg %p88
        %p223 = pneg %p117
        %p224 = pneg %p114
        %s225 = sand.u32 %s104, 1
        %s226 = scalar_lea.sflag [#allocation4], %s225
        %s227 = sand.u32 %s104, 1
        %s228 = smul.addr %s227, 48
        %s229 = scalar_lea.vmem [#allocation7], %s228
        %s230 = smul.u32 6, %s23
        %s231 = smul.u32 6, %s23
        %s232 = smul.u32 6, %s23
        %v233 = vld [vmem:[%s0] sm:$0xff]
        %v234 = vld [vmem:[%s0 + $0x8] sm:$0xff]
        %v235 = vld [vmem:[%s191] sm:$0xff]
        %v236 = vld [vmem:[%s191 + $0x8] sm:$0xff]
        %v237 = vld [vmem:[%s191 + $0x10] sm:$0xff]
        %v238 = vld [vmem:[%s191 + $0x18] sm:$0xff]
        %v239 = vld [vmem:[%s191 + $0x20] sm:$0xff]
        %v240 = vld [vmem:[%s191 + $0x28] sm:$0xff]
        %v241 = vld [vmem:[%s191 + $0x30] sm:$0xff]
        %v242 = vld [vmem:[%s191 + $0x38] sm:$0xff]
        %v243 = vld [vmem:[%s191 + $0x40] sm:$0xff]
        %v244 = vld [vmem:[%s191 + $0x48] sm:$0xff]
        %v245 = vld [vmem:[%s191 + $0x50] sm:$0xff]
        %v246 = vld [vmem:[%s191 + $0x58] sm:$0xff]
        %v247 = vld [vmem:[%s191 + $0x60] sm:$0xff]
        %v248 = vld [vmem:[%s191 + $0x68] sm:$0xff]
        %v249 = vld [vmem:[%s191 + $0x70] sm:$0xff]
        %v250 = vld [vmem:[%s191 + $0x78] sm:$0xff]
        %v251 = vld [vmem:[%s191 + $0x80] sm:$0xff]
        %v252 = vld [vmem:[%s191 + $0x88] sm:$0xff]
        %v253 = vld [vmem:[%s191 + $0x90] sm:$0xff]
        %v254 = vld [vmem:[%s191 + $0x98] sm:$0xff]
        %v255 = vld [vmem:[%s191 + $0xa0] sm:$0xff]
        %v256 = vld [vmem:[%s191 + $0xa8] sm:$0xff]
        %v257 = vld [vmem:[%s191 + $0xb0] sm:$0xff]
        %v258 = vld [vmem:[%s191 + $0xb8] sm:$0xff]
        %v259 = vld [vmem:[%s191 + $0xc0] sm:$0xff]
        %v260 = vld [vmem:[%s191 + $0xc8] sm:$0xff]
        %v261 = vld [vmem:[%s191 + $0xd0] sm:$0xff]
        %v262 = vld [vmem:[%s191 + $0xd8] sm:$0xff]
        %v263 = vld [vmem:[%s191 + $0xe0] sm:$0xff]
        %v264 = vld [vmem:[%s191 + $0xe8] sm:$0xff]
        %v265 = vld [vmem:[%s191 + $0xf0] sm:$0xff]
        %v266 = vld [vmem:[%s191 + $0xf8] sm:$0xff]
        %v267 = vld [vmem:[%s191 + $0x100] sm:$0xff]
        %v268 = vld [vmem:[%s191 + $0x108] sm:$0xff]
        %v269 = vld [vmem:[%s191 + $0x110] sm:$0xff]
        %v270 = vld [vmem:[%s191 + $0x118] sm:$0xff]
        %v271 = vld [vmem:[%s191 + $0x120] sm:$0xff]
        %v272 = vld [vmem:[%s191 + $0x128] sm:$0xff]
        %v273 = vld [vmem:[%s191 + $0x130] sm:$0xff]
        %v274 = vld [vmem:[%s191 + $0x138] sm:$0xff]
        %v275 = vld [vmem:[%s191 + $0x140] sm:$0xff]
        %v276 = vld [vmem:[%s191 + $0x148] sm:$0xff]
        %v277 = vld [vmem:[%s191 + $0x150] sm:$0xff]
        %v278 = vld [vmem:[%s191 + $0x158] sm:$0xff]
        %v279 = vld [vmem:[%s191 + $0x160] sm:$0xff]
        %v280 = vld [vmem:[%s191 + $0x168] sm:$0xff]
        %v281 = vld [vmem:[%s191 + $0x170] sm:$0xff]
        %v282 = vld [vmem:[%s191 + $0x178] sm:$0xff]
        %v283 = vld [vmem:[%s191 + $0x180] sm:$0xff]
        %v284 = vld [vmem:[%s191 + $0x188] sm:$0xff]
        %v285 = vld [vmem:[%s191 + $0x190] sm:$0xff]
        %v286 = vld [vmem:[%s191 + $0x198] sm:$0xff]
        %v287 = vld [vmem:[%s191 + $0x1a0] sm:$0xff]
        %v288 = vld [vmem:[%s191 + $0x1a8] sm:$0xff]
        %v289 = vld [vmem:[%s191 + $0x1b0] sm:$0xff]
        %v290 = vld [vmem:[%s191 + $0x1b8] sm:$0xff]
        %v291 = vld [vmem:[%s191 + $0x1c0] sm:$0xff]
        %v292 = vld [vmem:[%s191 + $0x1c8] sm:$0xff]
        %v293 = vld [vmem:[%s191 + $0x1d0] sm:$0xff]
        %v294 = vld [vmem:[%s191 + $0x1d8] sm:$0xff]
        %v295 = vld [vmem:[%s191 + $0x1e0] sm:$0xff]
        %v296 = vld [vmem:[%s191 + $0x1e8] sm:$0xff]
        %v297 = vld [vmem:[%s191 + $0x1f0] sm:$0xff]
        %v298 = vld [vmem:[%s191 + $0x1f8] sm:$0xff]
        %v299 = vld [vmem:[%s191 + $0x200] sm:$0xff]
        %v300 = vld [vmem:[%s191 + $0x208] sm:$0xff]
        %v301 = vld [vmem:[%s191 + $0x210] sm:$0xff]
        %v302 = vld [vmem:[%s191 + $0x218] sm:$0xff]
        %v303 = vld [vmem:[%s191 + $0x220] sm:$0xff]
        %v304 = vld [vmem:[%s191 + $0x228] sm:$0xff]
        %v305 = vld [vmem:[%s191 + $0x230] sm:$0xff]
        %v306 = vld [vmem:[%s191 + $0x238] sm:$0xff]
        %v307 = vld [vmem:[%s191 + $0x240] sm:$0xff]
        %v308 = vld [vmem:[%s191 + $0x248] sm:$0xff]
        %v309 = vld [vmem:[%s191 + $0x250] sm:$0xff]
        %v310 = vld [vmem:[%s191 + $0x258] sm:$0xff]
        %v311 = vld [vmem:[%s191 + $0x260] sm:$0xff]
        %v312 = vld [vmem:[%s191 + $0x268] sm:$0xff]
        %v313 = vld [vmem:[%s191 + $0x270] sm:$0xff]
        %v314 = vld [vmem:[%s191 + $0x278] sm:$0xff]
        %v315 = vld [vmem:[%s191 + $0x280] sm:$0xff]
        %v316 = vld [vmem:[%s191 + $0x288] sm:$0xff]
        %v317 = vld [vmem:[%s191 + $0x290] sm:$0xff]
        %v318 = vld [vmem:[%s191 + $0x298] sm:$0xff]
        %v319 = vld [vmem:[%s191 + $0x2a0] sm:$0xff]
        %v320 = vld [vmem:[%s191 + $0x2a8] sm:$0xff]
        %v321 = vld [vmem:[%s191 + $0x2b0] sm:$0xff]
        %v322 = vld [vmem:[%s191 + $0x2b8] sm:$0xff]
        %v323 = vld [vmem:[%s191 + $0x2c0] sm:$0xff]
        %v324 = vld [vmem:[%s191 + $0x2c8] sm:$0xff]
        %v325 = vld [vmem:[%s191 + $0x2d0] sm:$0xff]
        %v326 = vld [vmem:[%s191 + $0x2d8] sm:$0xff]
        %v327 = vld [vmem:[%s191 + $0x2e0] sm:$0xff]
        %v328 = vld [vmem:[%s191 + $0x2e8] sm:$0xff]
        %v329 = vld [vmem:[%s191 + $0x2f0] sm:$0xff]
        %v330 = vld [vmem:[%s191 + $0x2f8] sm:$0xff]
        %v331 = vld [vmem:[%s191 + $0x300] sm:$0xff]
        %v332 = vld [vmem:[%s191 + $0x308] sm:$0xff]
        %v333 = vld [vmem:[%s191 + $0x310] sm:$0xff]
        %v334 = vld [vmem:[%s191 + $0x318] sm:$0xff]
        %v335 = vld [vmem:[%s191 + $0x320] sm:$0xff]
        %v336 = vld [vmem:[%s191 + $0x328] sm:$0xff]
        %v337 = vld [vmem:[%s191 + $0x330] sm:$0xff]
        %v338 = vld [vmem:[%s191 + $0x338] sm:$0xff]
        %v339 = vld [vmem:[%s191 + $0x340] sm:$0xff]
        %v340 = vld [vmem:[%s191 + $0x348] sm:$0xff]
        %v341 = vld [vmem:[%s191 + $0x350] sm:$0xff]
        %v342 = vld [vmem:[%s191 + $0x358] sm:$0xff]
        %v343 = vld [vmem:[%s191 + $0x360] sm:$0xff]
        %v344 = vld [vmem:[%s191 + $0x368] sm:$0xff]
        %v345 = vld [vmem:[%s191 + $0x370] sm:$0xff]
        %v346 = vld [vmem:[%s191 + $0x378] sm:$0xff]
        %v347 = vld [vmem:[%s191 + $0x380] sm:$0xff]
        %v348 = vld [vmem:[%s191 + $0x388] sm:$0xff]
        %v349 = vld [vmem:[%s191 + $0x390] sm:$0xff]
        %v350 = vld [vmem:[%s191 + $0x398] sm:$0xff]
        %v351 = vld [vmem:[%s191 + $0x3a0] sm:$0xff]
        %v352 = vld [vmem:[%s191 + $0x3a8] sm:$0xff]
        %v353 = vld [vmem:[%s191 + $0x3b0] sm:$0xff]
        %v354 = vld [vmem:[%s191 + $0x3b8] sm:$0xff]
        %v355 = vld [vmem:[%s191 + $0x3c0] sm:$0xff]
        %v356 = vld [vmem:[%s191 + $0x3c8] sm:$0xff]
        %v357 = vld [vmem:[%s191 + $0x3d0] sm:$0xff]
        %v358 = vld [vmem:[%s191 + $0x3d8] sm:$0xff]
        %v359 = vld [vmem:[%s191 + $0x3e0] sm:$0xff]
        %v360 = vld [vmem:[%s191 + $0x3e8] sm:$0xff]
        %v361 = vld [vmem:[%s191 + $0x3f0] sm:$0xff]
        %v362 = vld [vmem:[%s191 + $0x3f8] sm:$0xff]
        %v363 = vld [vmem:[%s191 + $0x400] sm:$0xff]
        %v364 = vld [vmem:[%s191 + $0x408] sm:$0xff]
        %v365 = vld [vmem:[%s191 + $0x410] sm:$0xff]
        %v366 = vld [vmem:[%s191 + $0x418] sm:$0xff]
        %v367 = vld [vmem:[%s191 + $0x420] sm:$0xff]
        %v368 = vld [vmem:[%s191 + $0x428] sm:$0xff]
        %v369 = vld [vmem:[%s191 + $0x430] sm:$0xff]
        %v370 = vld [vmem:[%s191 + $0x438] sm:$0xff]
        %v371 = vld [vmem:[%s191 + $0x440] sm:$0xff]
        %v372 = vld [vmem:[%s191 + $0x448] sm:$0xff]
        %v373 = vld [vmem:[%s191 + $0x450] sm:$0xff]
        %v374 = vld [vmem:[%s191 + $0x458] sm:$0xff]
        %v375 = vld [vmem:[%s191 + $0x460] sm:$0xff]
        %v376 = vld [vmem:[%s191 + $0x468] sm:$0xff]
        %v377 = vld [vmem:[%s191 + $0x470] sm:$0xff]
        %v378 = vld [vmem:[%s191 + $0x478] sm:$0xff]
        %v379 = vld [vmem:[%s191 + $0x480] sm:$0xff]
        %v380 = vld [vmem:[%s191 + $0x488] sm:$0xff]
        %v381 = vld [vmem:[%s191 + $0x490] sm:$0xff]
        %v382 = vld [vmem:[%s191 + $0x498] sm:$0xff]
        %v383 = vld [vmem:[%s191 + $0x4a0] sm:$0xff]
        %v384 = vld [vmem:[%s191 + $0x4a8] sm:$0xff]
        %v385 = vld [vmem:[%s191 + $0x4b0] sm:$0xff]
        %v386 = vld [vmem:[%s191 + $0x4b8] sm:$0xff]
        %v387 = vld [vmem:[%s191 + $0x4c0] sm:$0xff]
        %v388 = vld [vmem:[%s191 + $0x4c8] sm:$0xff]
        %v389 = vld [vmem:[%s191 + $0x4d0] sm:$0xff]
        %v390 = vld [vmem:[%s191 + $0x4d8] sm:$0xff]
        %v391 = vld [vmem:[%s191 + $0x4e0] sm:$0xff]
        %v392 = vld [vmem:[%s191 + $0x4e8] sm:$0xff]
        %v393 = vld [vmem:[%s191 + $0x4f0] sm:$0xff]
        %v394 = vld [vmem:[%s191 + $0x4f8] sm:$0xff]
        %v395 = vld [vmem:[%s191 + $0x500] sm:$0xff]
        %v396 = vld [vmem:[%s191 + $0x508] sm:$0xff]
        %v397 = vld [vmem:[%s191 + $0x510] sm:$0xff]
        %v398 = vld [vmem:[%s191 + $0x518] sm:$0xff]
        %v399 = vld [vmem:[%s191 + $0x520] sm:$0xff]
        %v400 = vld [vmem:[%s191 + $0x528] sm:$0xff]
        %v401 = vld [vmem:[%s191 + $0x530] sm:$0xff]
        %v402 = vld [vmem:[%s191 + $0x538] sm:$0xff]
        %v403 = vld [vmem:[%s191 + $0x540] sm:$0xff]
        %v404 = vld [vmem:[%s191 + $0x548] sm:$0xff]
        %v405 = vld [vmem:[%s191 + $0x550] sm:$0xff]
        %v406 = vld [vmem:[%s191 + $0x558] sm:$0xff]
        %v407 = vld [vmem:[%s191 + $0x560] sm:$0xff]
        %v408 = vld [vmem:[%s191 + $0x568] sm:$0xff]
        %v409 = vld [vmem:[%s191 + $0x570] sm:$0xff]
        %v410 = vld [vmem:[%s191 + $0x578] sm:$0xff]
        %v411 = vld [vmem:[%s191 + $0x580] sm:$0xff]
        %v412 = vld [vmem:[%s191 + $0x588] sm:$0xff]
        %v413 = vld [vmem:[%s191 + $0x590] sm:$0xff]
        %v414 = vld [vmem:[%s191 + $0x598] sm:$0xff]
        %v415 = vld [vmem:[%s191 + $0x5a0] sm:$0xff]
        %v416 = vld [vmem:[%s191 + $0x5a8] sm:$0xff]
        %v417 = vld [vmem:[%s191 + $0x5b0] sm:$0xff]
        %v418 = vld [vmem:[%s191 + $0x5b8] sm:$0xff]
        %v419 = vld [vmem:[%s191 + $0x5c0] sm:$0xff]
        %v420 = vld [vmem:[%s191 + $0x5c8] sm:$0xff]
        %v421 = vld [vmem:[%s191 + $0x5d0] sm:$0xff]
        %v422 = vld [vmem:[%s191 + $0x5d8] sm:$0xff]
        %v423 = vld [vmem:[%s191 + $0x5e0] sm:$0xff]
        %v424 = vld [vmem:[%s191 + $0x5e8] sm:$0xff]
        %v425 = vld [vmem:[%s191 + $0x5f0] sm:$0xff]
        %v426 = vld [vmem:[%s191 + $0x5f8] sm:$0xff]
        %v427 = vld [vmem:[%s201] sm:$0x3f]
        %v429 = vperm.slane %v427, 0
        %v430 = vperm.slane %v427, 1
        %v431 = vperm.slane %v427, 2
        %v432 = vperm.slane %v427, 3
        %v433 = vperm.slane %v427, 4
        %v434 = vperm.slane %v427, 5
        %441 = vmatpush.msra.mxu0 %v325
        %442 = vmatpush.msra.mxu0 %v319
        %443 = vmatpush.msra.mxu0 %v313
        %444 = vmatpush.msra.mxu0 %v307
        %445 = vmatpush.msra.mxu0 %v301
        %446 = vmatpush.msra.mxu0 %v295
        %447 = vmatpush.msra.mxu0 %v289
        %448 = vmatpush.msra.mxu0 %v283
        %449 = vmatpush.msra.mxu0 %v277
        %450 = vmatpush.msra.mxu0 %v271
        %451 = vmatpush.msra.mxu0 %v265
        %452 = vmatpush.msra.mxu0 %v259
        %453 = vmatpush.msra.mxu0 %v253
        %454 = vmatpush.msra.mxu0 %v247
        %455 = vmatpush.msra.mxu0 %v241
        %456 = vmatpush.msra.mxu0 %v235
        %457 = vmatmul.f32.gmra.mxu0 %v233
        %v458 = vpop.f32.mrf.mxu0
        %v459 = vadd.f32 %v429, %v458
        %460 = vdwg.mxu0
        %461 = vmatpush.msra.mxu0 %v421
        %462 = vmatpush.msra.mxu0 %v415
        %463 = vmatpush.msra.mxu0 %v409
        %464 = vmatpush.msra.mxu0 %v403
        %465 = vmatpush.msra.mxu0 %v397
        %466 = vmatpush.msra.mxu0 %v391
        %467 = vmatpush.msra.mxu0 %v385
        %468 = vmatpush.msra.mxu0 %v379
        %469 = vmatpush.msra.mxu0 %v373
        %470 = vmatpush.msra.mxu0 %v367
        %471 = vmatpush.msra.mxu0 %v361
        %472 = vmatpush.msra.mxu0 %v355
        %473 = vmatpush.msra.mxu0 %v349
        %474 = vmatpush.msra.mxu0 %v343
        %475 = vmatpush.msra.mxu0 %v337
        %476 = vmatpush.msra.mxu0 %v331
        %477 = vmatmul.f32.gmra.mxu0 %v234
        %v478 = vpop.f32.mrf.mxu0
        %v479 = vadd.f32 %v459, %v478
        %480 = vdwg.mxu0
        %481 = vmatpush.msra.mxu0 %v326
        %482 = vmatpush.msra.mxu0 %v320
        %483 = vmatpush.msra.mxu0 %v314
        %484 = vmatpush.msra.mxu0 %v308
        %485 = vmatpush.msra.mxu0 %v302
        %486 = vmatpush.msra.mxu0 %v296
        %487 = vmatpush.msra.mxu0 %v290
        %488 = vmatpush.msra.mxu0 %v284
        %489 = vmatpush.msra.mxu0 %v278
        %490 = vmatpush.msra.mxu0 %v272
        %491 = vmatpush.msra.mxu0 %v266
        %492 = vmatpush.msra.mxu0 %v260
        %493 = vmatpush.msra.mxu0 %v254
        %494 = vmatpush.msra.mxu0 %v248
        %495 = vmatpush.msra.mxu0 %v242
        %496 = vmatpush.msra.mxu0 %v236
        %497 = vmatmul.f32.gmra.mxu0 %v233
        %v498 = vpop.f32.mrf.mxu0
        %v499 = vadd.f32 %v430, %v498
        %500 = vdwg.mxu0
        %501 = vmatpush.msra.mxu0 %v422
        %502 = vmatpush.msra.mxu0 %v416
        %503 = vmatpush.msra.mxu0 %v410
        %504 = vmatpush.msra.mxu0 %v404
        %505 = vmatpush.msra.mxu0 %v398
        %506 = vmatpush.msra.mxu0 %v392
        %507 = vmatpush.msra.mxu0 %v386
        %508 = vmatpush.msra.mxu0 %v380
        %509 = vmatpush.msra.mxu0 %v374
        %510 = vmatpush.msra.mxu0 %v368
        %511 = vmatpush.msra.mxu0 %v362
        %512 = vmatpush.msra.mxu0 %v356
        %513 = vmatpush.msra.mxu0 %v350
        %514 = vmatpush.msra.mxu0 %v344
        %515 = vmatpush.msra.mxu0 %v338
        %516 = vmatpush.msra.mxu0 %v332
        %517 = vmatmul.f32.gmra.mxu0 %v234
        %v518 = vpop.f32.mrf.mxu0
        %v519 = vadd.f32 %v499, %v518
        %520 = vdwg.mxu0
        %521 = vmatpush.msra.mxu0 %v327
        %522 = vmatpush.msra.mxu0 %v321
        %523 = vmatpush.msra.mxu0 %v315
        %524 = vmatpush.msra.mxu0 %v309
        %525 = vmatpush.msra.mxu0 %v303
        %526 = vmatpush.msra.mxu0 %v297
        %527 = vmatpush.msra.mxu0 %v291
        %528 = vmatpush.msra.mxu0 %v285
        %529 = vmatpush.msra.mxu0 %v279
        %530 = vmatpush.msra.mxu0 %v273
        %531 = vmatpush.msra.mxu0 %v267
        %532 = vmatpush.msra.mxu0 %v261
        %533 = vmatpush.msra.mxu0 %v255
        %534 = vmatpush.msra.mxu0 %v249
        %535 = vmatpush.msra.mxu0 %v243
        %536 = vmatpush.msra.mxu0 %v237
        %537 = vmatmul.f32.gmra.mxu0 %v233
        %v538 = vpop.f32.mrf.mxu0
        %v539 = vadd.f32 %v431, %v538
        %540 = vdwg.mxu0
        %541 = vmatpush.msra.mxu0 %v423
        %542 = vmatpush.msra.mxu0 %v417
        %543 = vmatpush.msra.mxu0 %v411
        %544 = vmatpush.msra.mxu0 %v405
        %545 = vmatpush.msra.mxu0 %v399
        %546 = vmatpush.msra.mxu0 %v393
        %547 = vmatpush.msra.mxu0 %v387
        %548 = vmatpush.msra.mxu0 %v381
        %549 = vmatpush.msra.mxu0 %v375
        %550 = vmatpush.msra.mxu0 %v369
        %551 = vmatpush.msra.mxu0 %v363
        %552 = vmatpush.msra.mxu0 %v357
        %553 = vmatpush.msra.mxu0 %v351
        %554 = vmatpush.msra.mxu0 %v345
        %555 = vmatpush.msra.mxu0 %v339
        %556 = vmatpush.msra.mxu0 %v333
        %557 = vmatmul.f32.gmra.mxu0 %v234
        %v558 = vpop.f32.mrf.mxu0
        %v559 = vadd.f32 %v539, %v558
        %560 = vdwg.mxu0
        %561 = vmatpush.msra.mxu0 %v328
        %562 = vmatpush.msra.mxu0 %v322
        %563 = vmatpush.msra.mxu0 %v316
        %564 = vmatpush.msra.mxu0 %v310
        %565 = vmatpush.msra.mxu0 %v304
        %566 = vmatpush.msra.mxu0 %v298
        %567 = vmatpush.msra.mxu0 %v292
        %568 = vmatpush.msra.mxu0 %v286
        %569 = vmatpush.msra.mxu0 %v280
        %570 = vmatpush.msra.mxu0 %v274
        %571 = vmatpush.msra.mxu0 %v268
        %572 = vmatpush.msra.mxu0 %v262
        %573 = vmatpush.msra.mxu0 %v256
        %574 = vmatpush.msra.mxu0 %v250
        %575 = vmatpush.msra.mxu0 %v244
        %576 = vmatpush.msra.mxu0 %v238
        %577 = vmatmul.f32.gmra.mxu0 %v233
        %v578 = vpop.f32.mrf.mxu0
        %v579 = vadd.f32 %v432, %v578
        %580 = vdwg.mxu0
        %581 = vmatpush.msra.mxu0 %v424
        %582 = vmatpush.msra.mxu0 %v418
        %583 = vmatpush.msra.mxu0 %v412
        %584 = vmatpush.msra.mxu0 %v406
        %585 = vmatpush.msra.mxu0 %v400
        %586 = vmatpush.msra.mxu0 %v394
        %587 = vmatpush.msra.mxu0 %v388
        %588 = vmatpush.msra.mxu0 %v382
        %589 = vmatpush.msra.mxu0 %v376
        %590 = vmatpush.msra.mxu0 %v370
        %591 = vmatpush.msra.mxu0 %v364
        %592 = vmatpush.msra.mxu0 %v358
        %593 = vmatpush.msra.mxu0 %v352
        %594 = vmatpush.msra.mxu0 %v346
        %595 = vmatpush.msra.mxu0 %v340
        %596 = vmatpush.msra.mxu0 %v334
        %597 = vmatmul.f32.gmra.mxu0 %v234
        %v598 = vpop.f32.mrf.mxu0
        %v599 = vadd.f32 %v579, %v598
        %600 = vdwg.mxu0
        %601 = vmatpush.msra.mxu0 %v329
        %602 = vmatpush.msra.mxu0 %v323
        %603 = vmatpush.msra.mxu0 %v317
        %604 = vmatpush.msra.mxu0 %v311
        %605 = vmatpush.msra.mxu0 %v305
        %606 = vmatpush.msra.mxu0 %v299
        %607 = vmatpush.msra.mxu0 %v293
        %608 = vmatpush.msra.mxu0 %v287
        %609 = vmatpush.msra.mxu0 %v281
        %610 = vmatpush.msra.mxu0 %v275
        %611 = vmatpush.msra.mxu0 %v269
        %612 = vmatpush.msra.mxu0 %v263
        %613 = vmatpush.msra.mxu0 %v257
        %614 = vmatpush.msra.mxu0 %v251
        %615 = vmatpush.msra.mxu0 %v245
        %616 = vmatpush.msra.mxu0 %v239
        %617 = vmatmul.f32.gmra.mxu0 %v233
        %v618 = vpop.f32.mrf.mxu0
        %v619 = vadd.f32 %v433, %v618
        %620 = vdwg.mxu0
        %621 = vmatpush.msra.mxu0 %v425
        %622 = vmatpush.msra.mxu0 %v419
        %623 = vmatpush.msra.mxu0 %v413
        %624 = vmatpush.msra.mxu0 %v407
        %625 = vmatpush.msra.mxu0 %v401
        %626 = vmatpush.msra.mxu0 %v395
        %627 = vmatpush.msra.mxu0 %v389
        %628 = vmatpush.msra.mxu0 %v383
        %629 = vmatpush.msra.mxu0 %v377
        %630 = vmatpush.msra.mxu0 %v371
        %631 = vmatpush.msra.mxu0 %v365
        %632 = vmatpush.msra.mxu0 %v359
        %633 = vmatpush.msra.mxu0 %v353
        %634 = vmatpush.msra.mxu0 %v347
        %635 = vmatpush.msra.mxu0 %v341
        %636 = vmatpush.msra.mxu0 %v335
        %637 = vmatmul.f32.gmra.mxu0 %v234
        %v638 = vpop.f32.mrf.mxu0
        %v639 = vadd.f32 %v619, %v638
        %640 = vdwg.mxu0
        %641 = vmatpush.msra.mxu0 %v330
        %642 = vmatpush.msra.mxu0 %v324
        %643 = vmatpush.msra.mxu0 %v318
        %644 = vmatpush.msra.mxu0 %v312
        %645 = vmatpush.msra.mxu0 %v306
        %646 = vmatpush.msra.mxu0 %v300
        %647 = vmatpush.msra.mxu0 %v294
        %648 = vmatpush.msra.mxu0 %v288
        %649 = vmatpush.msra.mxu0 %v282
        %650 = vmatpush.msra.mxu0 %v276
        %651 = vmatpush.msra.mxu0 %v270
        %652 = vmatpush.msra.mxu0 %v264
        %653 = vmatpush.msra.mxu0 %v258
        %654 = vmatpush.msra.mxu0 %v252
        %655 = vmatpush.msra.mxu0 %v246
        %656 = vmatpush.msra.mxu0 %v240
        %657 = vmatmul.f32.gmra.mxu0 %v233
        %v658 = vpop.f32.mrf.mxu0
        %v659 = vadd.f32 %v434, %v658
        %660 = vdwg.mxu0
        %661 = vmatpush.msra.mxu0 %v426
        %662 = vmatpush.msra.mxu0 %v420
        %663 = vmatpush.msra.mxu0 %v414
        %664 = vmatpush.msra.mxu0 %v408
        %665 = vmatpush.msra.mxu0 %v402
        %666 = vmatpush.msra.mxu0 %v396
        %667 = vmatpush.msra.mxu0 %v390
        %668 = vmatpush.msra.mxu0 %v384
        %669 = vmatpush.msra.mxu0 %v378
        %670 = vmatpush.msra.mxu0 %v372
        %671 = vmatpush.msra.mxu0 %v366
        %672 = vmatpush.msra.mxu0 %v360
        %673 = vmatpush.msra.mxu0 %v354
        %674 = vmatpush.msra.mxu0 %v348
        %675 = vmatpush.msra.mxu0 %v342
        %676 = vmatpush.msra.mxu0 %v336
        %677 = vmatmul.f32.gmra.mxu0 %v234
        %v678 = vpop.f32.mrf.mxu0
        %v679 = vadd.f32 %v659, %v678
        %680 = vdwg.mxu0
        %681 = vst [vmem:[%s229] sm:$0xff] %v479
        %682 = vst [vmem:[%s229 + $0x8] sm:$0xff] %v519
        %683 = vst [vmem:[%s229 + $0x10] sm:$0xff] %v559
        %684 = vst [vmem:[%s229 + $0x18] sm:$0xff] %v599
        %685 = vst [vmem:[%s229 + $0x20] sm:$0xff] %v639
        %686 = vst [vmem:[%s229 + $0x28] sm:$0xff] %v679
        %s687 = sand.u32 %s104, 1
        %s688 = scalar_lea.sflag [#allocation4], %s687
        %s689 = sand.u32 %s104, 1
        %s690 = smul.addr %s689, 48
        %s691 = scalar_lea.vmem [#allocation7], %s690
        // Predicated region
        $region41: #{ada_layer_norm_single.3} parent=31 // pred_check
          %p692 = pneg %p114
        $region42: #{ada_layer_norm_single.3} parent=31 // pred_check_branch
          %694 = sbr.rel (%p692) target = $region44
        $region43: #{ada_layer_norm_single.3} parent=31 // pred_region
          %s695 = smul.u32 6, %s23
          %697 = vsyncadd %s688, 0
          %s698 = smul.addr %s695, 8
          %s699 = scalar_lea.hbm %s3, %s698
          %s701 = sshll.u32 %s691, 4
          %s702 = int_to_ptr.vmem [resolvable:$true] %s701
          %s703 = sshll.u32 %s699, 4
          %s704 = int_to_ptr.hbm [resolvable:$true] %s703
          %706 = dma.vmem_to_hbm [thread:$0]  %s702, 768, %s704, %s688
        $region44: #{ada_layer_norm_single.3} parent=31 // pred_fallthru
          _
      $region32: #{ada_layer_norm_single.3} parent=5 // pred_fallthru
        _
      %p707 = scmp.le.s32.totalorder 2, %s18
      // Predicated region
      $region45: #{ada_layer_norm_single.3} parent=5 // pred_check
        %p708 = pneg %p707
      $region46: #{ada_layer_norm_single.3} parent=5 // pred_check_branch
        %710 = sbr.rel (%p708) target = $region48
      $region47: #{ada_layer_norm_single.3} parent=5 // pred_region
        %s711 = ssub.s32 %s18, 2
        // Predicated region
        $region49: #{ada_layer_norm_single.3} parent=47 // pred_check
          %p712 = pneg %p120
        $region50: #{ada_layer_norm_single.3} parent=47 // pred_check_branch
          %714 = sbr.rel (%p712) target = $region52
        $region51: #{ada_layer_norm_single.3} parent=47 // pred_region
          %s715 = sand.u32 %s105, 1
          %s716 = scalar_lea.sflag [#allocation4], %s715
          %s717 = sand.u32 %s105, 1
          %s718 = smul.addr %s717, 48
          %s719 = scalar_lea.vmem [#allocation7], %s718
          %721 = dma.done %s716, 768
        $region52: #{ada_layer_norm_single.3} parent=47 // pred_fallthru
          _
      $region48: #{ada_layer_norm_single.3} parent=5 // pred_fallthru
        _
    $region6: #{ada_layer_norm_single.3} parent=1 // loop_footer
      %s22 = sadd.s32 1, %s18
    $region7: #{ada_layer_norm_single.3} parent=1 // loop_footer_branch
      %17 = sbr.rel target = $region3
    $region8: #{ada_layer_norm_single.3} parent=1 // loop_exit
      _
    %722 = vsyncpa [#allocation3], 1
    %s723 = scalar_lea.sflag [#allocation3], 1
    %724 = vsyncpa %s723, 1
    %725 = vsyncpa [#allocation6], 1
    %s726 = scalar_lea.sflag [#allocation6], 1
    %727 = vsyncpa %s726, 1
    %728 = vsyncpa [#allocation4], 1
    %s729 = scalar_lea.sflag [#allocation4], 1
    %730 = vsyncpa %s729, 1

</llo_original>
